<compile_context>
chip_gen: v7x
topology: tpu7x:2x2x1
jax: 0.10.0
libtpu: 0.0.40
codegen_flags: <defaults>
</compile_context>

<pallas_src>
import functools

import jax
import jax.numpy as jnp
from jax.experimental import pallas as pl
from jax.experimental.pallas import tpu as pltpu


def _round_up(x, m):
    return ((x + m - 1) // m) * m


def decoder_kernel(z_ref, w1_ref, b1_ref, w2_ref, b2_ref, out_ref):
    # ---- Linear 1 (MXU, bf16 x bf16 -> f32 acc) + bias + ReLU --------------
    h = jnp.dot(z_ref[...], w1_ref[...], preferred_element_type=jnp.float32)
    h = jnp.maximum(h + b1_ref[...], 0.0)                 # (TB, hidden_p) f32
    # ---- Linear 2 (MXU) + bias ---------------------------------------------
    h = h.astype(w2_ref.dtype)                            # back to bf16 for MXU
    y = jnp.dot(h, w2_ref[...], preferred_element_type=jnp.float32)
    y = y + b2_ref[...]                                   # (TB, out_p) f32
    # ---- Sigmoid: exp on EUP + approx reciprocal on EUP (no VALU divide) ---
    out_ref[...] = pl.reciprocal(1.0 + jnp.exp(-y), approx=True).astype(
        out_ref.dtype
    )


@functools.partial(jax.jit, static_argnames=("tile_b", "use_bf16"))
def decoder_forward(z, w1, b1, w2, b2, *, tile_b=256, use_bf16=True):
    """Decoder forward.  z: (B, z_dim); w1: (z_dim, H); b1: (H,) or (1, H);
    w2: (H, 784); b2: (784,) or (1, 784).  Returns (B, 784) float32."""
    B, z_dim = z.shape
    hidden = w1.shape[1]
    out_dim = w2.shape[1]

    b1 = b1.reshape(1, hidden)
    b2 = b2.reshape(1, out_dim)

    # --- pad feature dims to lane multiples (128) for lane-dense layout -----
    hidden_p = _round_up(hidden, 128)
    out_p = _round_up(out_dim, 128)

    # --- choose batch tile: fill the MXU, but never exceed (padded) batch ---
    tile_b = max(8, min(_round_up(tile_b, 8), _round_up(B, 8)))
    B_p = _round_up(B, tile_b)

    # --- zero-pad operands (zeros are neutral for ReLU + the second matmul) -
    z_p = jnp.pad(z, ((0, B_p - B), (0, 0)))
    w1_p = jnp.pad(w1, ((0, 0), (0, hidden_p - hidden)))
    b1_p = jnp.pad(b1, ((0, 0), (0, hidden_p - hidden)))
    w2_p = jnp.pad(w2, ((0, hidden_p - hidden), (0, out_p - out_dim)))
    b2_p = jnp.pad(b2, ((0, 0), (0, out_p - out_dim)))

    # --- bf16 matmul operands, f32 accumulation / biases ---------------------
    mm_dtype = jnp.bfloat16 if use_bf16 else jnp.float32
    z_p = z_p.astype(mm_dtype)
    w1_p = w1_p.astype(mm_dtype)
    w2_p = w2_p.astype(mm_dtype)
    b1_p = b1_p.astype(jnp.float32)
    b2_p = b2_p.astype(jnp.float32)

    grid = (B_p // tile_b,)
    out_padded = pl.pallas_call(
        decoder_kernel,
        out_shape=jax.ShapeDtypeStruct((B_p, out_p), jnp.float32),
        grid_spec=pltpu.PrefetchScalarGridSpec(
            num_scalar_prefetch=0,
            grid=grid,
            in_specs=[
                # batch tile of the latent codes
                pl.BlockSpec((tile_b, z_dim), lambda i: (i, 0)),
                # weights / biases: constant index_map -> resident in VMEM
                pl.BlockSpec((z_dim, hidden_p), lambda i: (0, 0)),
                pl.BlockSpec((1, hidden_p), lambda i: (0, 0)),
                pl.BlockSpec((hidden_p, out_p), lambda i: (0, 0)),
                pl.BlockSpec((1, out_p), lambda i: (0, 0)),
            ],
            out_specs=pl.BlockSpec((tile_b, out_p), lambda i: (i, 0)),
        ),
        compiler_params=pltpu.CompilerParams(
            dimension_semantics=("parallel",)
        ),
    )(z_p, w1_p, b1_p, w2_p, b2_p)

    # strip batch / lane padding back to the module's output shape
    return out_padded[:B, :out_dim]


def init_decoder_params(key, z_dim=20, hidden_dim=500, out_dim=784):
    """Deterministic init mimicking PyTorch nn.Linear default
    (U[-1/sqrt(fan_in), 1/sqrt(fan_in)])."""
    k1, k2, k3, k4 = jax.random.split(key, 4)
    bound1 = 1.0 / jnp.sqrt(z_dim)
    bound2 = 1.0 / jnp.sqrt(hidden_dim)
    w1 = jax.random.uniform(k1, (z_dim, hidden_dim), jnp.float32, -bound1, bound1)
    b1 = jax.random.uniform(k2, (1, hidden_dim), jnp.float32, -bound1, bound1)
    w2 = jax.random.uniform(k3, (hidden_dim, out_dim), jnp.float32, -bound2, bound2)
    b2 = jax.random.uniform(k4, (1, out_dim), jnp.float32, -bound2, bound2)
    return w1, b1, w2, b2


def decoder_reference(z, w1, b1, w2, b2):
    h = jnp.maximum(z @ w1 + b1, 0.0)
    return jax.nn.sigmoid(h @ w2 + b2)


if __name__ == "__main__":
    key = jax.random.PRNGKey(0)
    k_params, k_z = jax.random.split(key)

    B, Z_DIM, HIDDEN, OUT = 16, 20, 500, 784
    w1, b1, w2, b2 = init_decoder_params(k_params, Z_DIM, HIDDEN, OUT)
    z = jax.random.normal(k_z, (B, Z_DIM), jnp.float32)

    out = decoder_forward(z, w1, b1, w2, b2)
    out = jax.block_until_ready(out)
    assert out.shape == (B, OUT)

    # Reference 1: full f32 reference (loose tolerance: kernel uses bf16 MXU).
    ref_f32 = jax.block_until_ready(decoder_reference(z, w1, b1, w2, b2))
    assert jnp.allclose(out, ref_f32, atol=3e-2), "mismatch vs f32 reference"

    # Reference 2: same bf16-rounded operands, f32 math (tight tolerance).
    bf = lambda x: x.astype(jnp.bfloat16).astype(jnp.float32)
    ref_bf16 = jax.block_until_ready(
        decoder_reference(bf(z), bf(w1), b1, bf(w2), b2)
    )
    assert jnp.allclose(out, ref_bf16, atol=5e-3), "mismatch vs bf16 reference"

    print("KERNEL_OK")
</pallas_src>

<mosaic_0001>
module attributes {stable_mosaic.version = 11 : i64} {
  func.func @decoder_kernel(%arg0: i32, %arg1: memref<16x20xbf16, #tpu.memory_space<vmem>>, %arg2: memref<20x512xbf16, #tpu.memory_space<vmem>>, %arg3: memref<1x512xf32, #tpu.memory_space<vmem>>, %arg4: memref<512x896xbf16, #tpu.memory_space<vmem>>, %arg5: memref<1x896xf32, #tpu.memory_space<vmem>>, %arg6: memref<16x896xf32, #tpu.memory_space<vmem>>) attributes {dimension_semantics = [#tpu.dimension_semantics<parallel>], iteration_bounds = array<i64: 1>, scalar_prefetch = 0 : i64, scratch_operands = 0 : i64, tpu.core_type = #tpu.core_type<tc>, window_params = [{transform_indices = @transform_0, window_bounds = array<i64: 16, 20>}, {pipeline_mode = #tpu.pipeline_mode<synchronous>, transform_indices = @transform_1, window_bounds = array<i64: 20, 512>}, {pipeline_mode = #tpu.pipeline_mode<synchronous>, transform_indices = @transform_2, window_bounds = array<i64: 1, 512>}, {pipeline_mode = #tpu.pipeline_mode<synchronous>, transform_indices = @transform_3, window_bounds = array<i64: 512, 896>}, {pipeline_mode = #tpu.pipeline_mode<synchronous>, transform_indices = @transform_4, window_bounds = array<i64: 1, 896>}, {transform_indices = @transform_5, window_bounds = array<i64: 16, 896>}]} {
    %c0 = arith.constant 0 : index
    %c0_0 = arith.constant 0 : index
    %0 = vector.load %arg1[%c0, %c0_0] : memref<16x20xbf16, #tpu.memory_space<vmem>>, vector<16x20xbf16>
    %c0_1 = arith.constant 0 : index
    %c0_2 = arith.constant 0 : index
    %1 = vector.load %arg2[%c0_1, %c0_2] : memref<20x512xbf16, #tpu.memory_space<vmem>>, vector<20x512xbf16>
    %cst = arith.constant dense<0.000000e+00> : vector<16x512xf32>
    %2 = tpu.matmul %0, %1, %cst {dimension_numbers = #tpu.dot_dimension_numbers<[1], [0], [0], [1], [0, 0, 1, 1], [], []>} : vector<16x20xbf16>, vector<20x512xbf16>, vector<16x512xf32> -> vector<16x512xf32>
    %c0_3 = arith.constant 0 : index
    %c0_4 = arith.constant 0 : index
    %3 = vector.load %arg3[%c0_3, %c0_4] : memref<1x512xf32, #tpu.memory_space<vmem>>, vector<1x512xf32>
    %4 = vector.broadcast %3 : vector<1x512xf32> to vector<16x512xf32>
    %5 = arith.addf %2, %4 : vector<16x512xf32>
    %cst_5 = arith.constant 0.000000e+00 : f32
    %6 = vector.broadcast %cst_5 : f32 to vector<16x512xf32>
    %7 = arith.maximumf %5, %6 : vector<16x512xf32>
    %8 = arith.truncf %7 : vector<16x512xf32> to vector<16x512xbf16>
    %c0_6 = arith.constant 0 : index
    %c0_7 = arith.constant 0 : index
    %9 = vector.load %arg4[%c0_6, %c0_7] : memref<512x896xbf16, #tpu.memory_space<vmem>>, vector<512x896xbf16>
    %cst_8 = arith.constant dense<0.000000e+00> : vector<16x896xf32>
    %10 = tpu.matmul %8, %9, %cst_8 {dimension_numbers = #tpu.dot_dimension_numbers<[1], [0], [0], [1], [0, 0, 1, 1], [], []>} : vector<16x512xbf16>, vector<512x896xbf16>, vector<16x896xf32> -> vector<16x896xf32>
    %c0_9 = arith.constant 0 : index
    %c0_10 = arith.constant 0 : index
    %11 = vector.load %arg5[%c0_9, %c0_10] : memref<1x896xf32, #tpu.memory_space<vmem>>, vector<1x896xf32>
    %12 = vector.broadcast %11 : vector<1x896xf32> to vector<16x896xf32>
    %13 = arith.addf %10, %12 : vector<16x896xf32>
    %cst_11 = arith.constant 0.000000e+00 : f32
    %14 = vector.broadcast %cst_11 : f32 to vector<16x896xf32>
    %15 = arith.subf %14, %13 : vector<16x896xf32>
    %16 = math.exp %15 : vector<16x896xf32>
    %cst_12 = arith.constant 1.000000e+00 : f32
    %17 = vector.broadcast %cst_12 : f32 to vector<16x896xf32>
    %18 = arith.addf %17, %16 : vector<16x896xf32>
    %19 = tpu.reciprocal %18 {approx = true} : vector<16x896xf32> -> vector<16x896xf32>
    %c0_13 = arith.constant 0 : index
    %c0_14 = arith.constant 0 : index
    %20 = vector.load %arg6[%c0_13, %c0_14] : memref<16x896xf32, #tpu.memory_space<vmem>>, vector<16x896xf32>
    tpu.vector_store %arg6[%c0_13, %c0_14], %19 {strides = array<i32>} : memref<16x896xf32, #tpu.memory_space<vmem>>, vector<16x896xf32>,
    return
  }
  func.func @transform_0(%arg0: i32) -> (i32, i32) {
    %c0_i32 = arith.constant 0 : i32
    %c0_i32_0 = arith.constant 0 : i32
    return %arg0, %c0_i32 : i32, i32
  }
  func.func @transform_1(%arg0: i32) -> (i32, i32) {
    %c0_i32 = arith.constant 0 : i32
    %c0_i32_0 = arith.constant 0 : i32
    %c0_i32_1 = arith.constant 0 : i32
    return %c0_i32, %c0_i32_0 : i32, i32
  }
  func.func @transform_2(%arg0: i32) -> (i32, i32) {
    %c0_i32 = arith.constant 0 : i32
    %c0_i32_0 = arith.constant 0 : i32
    %c0_i32_1 = arith.constant 0 : i32
    return %c0_i32, %c0_i32_0 : i32, i32
  }
  func.func @transform_3(%arg0: i32) -> (i32, i32) {
    %c0_i32 = arith.constant 0 : i32
    %c0_i32_0 = arith.constant 0 : i32
    %c0_i32_1 = arith.constant 0 : i32
    return %c0_i32, %c0_i32_0 : i32, i32
  }
  func.func @transform_4(%arg0: i32) -> (i32, i32) {
    %c0_i32 = arith.constant 0 : i32
    %c0_i32_0 = arith.constant 0 : i32
    %c0_i32_1 = arith.constant 0 : i32
    return %c0_i32, %c0_i32_0 : i32, i32
  }
  func.func @transform_5(%arg0: i32) -> (i32, i32) {
    %c0_i32 = arith.constant 0 : i32
    %c0_i32_0 = arith.constant 0 : i32
    return %arg0, %c0_i32 : i32, i32
  }
}

</mosaic_0001>

<llo_original>
// kernel: decoder_forward.1
$region0: #{decoder_forward.1}
  #allocation0 [shape = 'u32[]', space=smem, size = 0x4, offset = 0x4, fixed_abs, tag = 'smem constant byte address 0x4 - core index']
  #allocation1 [shape = 'u32[144,128]{1,0:T(1,128)}', space=vmem, size = 0x12000, scoped, tag = 'internal scratch']
  %s0 = inlined_call_operand.vmem [shape: bf16[16,20], index: 0, kind: input, shape index: {}]
  %s1 = inlined_call_operand.vmem [shape: bf16[20,512], index: 1, kind: input, shape index: {}]
  %s2 = inlined_call_operand.vmem [shape: f32[1,512], index: 2, kind: input, shape index: {}]
  %s3 = inlined_call_operand.vmem [shape: bf16[512,896], index: 3, kind: input, shape index: {}]
  %s4 = inlined_call_operand.vmem [shape: f32[1,896], index: 4, kind: input, shape index: {}]
  %s5 = inlined_call_operand.hbm [shape: f32[16,896], index: 5, kind: output, shape index: {}]
  %s6 = sld [smem:[#allocation0]]
  $region30: #{decoder_forward.1} parent=0
    _
  %s8 = ssub.s32 1, %s6
  %s9 = scalar_select 0, %s8, %s6
  $region1: #{decoder_forward.1} parent=0
    #allocation2 [shape = 'u8[57344]{0}', space=vmem, size = 0xe000, scoped, tag = 'output window, operand 0, single buffered']
    #allocation3 [shape = 's32[1]{0}', space=sflag, size = 0x4, scoped, tag = 'scoped memory for decoder_forward.1']
    %10 = vsyncpa [#allocation3], 0
    // Predicated region
    $region2: #{decoder_forward.1} parent=1 // pred_check
      _
    $region3: #{decoder_forward.1} parent=1 // pred_check_branch
      %12 = sbr.rel (0) target = $region5
    $region4: #{decoder_forward.1} parent=1 // pred_region
      _
    $region5: #{decoder_forward.1} parent=1 // pred_fallthru
      _
    // Predicated region
    $region6: #{decoder_forward.1} parent=1 // pred_check
      _
    $region7: #{decoder_forward.1} parent=1 // pred_check_branch
      %14 = sbr.rel (0) target = $region9
    $region8: #{decoder_forward.1} parent=1 // pred_region
      _
    $region9: #{decoder_forward.1} parent=1 // pred_fallthru
      _
    // Predicated region
    $region10: #{decoder_forward.1} parent=1 // pred_check
      _
    $region11: #{decoder_forward.1} parent=1 // pred_check_branch
      %16 = sbr.rel (0) target = $region13
    $region12: #{decoder_forward.1} parent=1 // pred_region
      _
    $region13: #{decoder_forward.1} parent=1 // pred_fallthru
      _
    // Predicated region
    $region14: #{decoder_forward.1} parent=1 // pred_check
      _
    $region15: #{decoder_forward.1} parent=1 // pred_check_branch
      %18 = sbr.rel (0) target = $region17
    $region16: #{decoder_forward.1} parent=1 // pred_region
      _
    $region17: #{decoder_forward.1} parent=1 // pred_fallthru
      _
    // Predicated region
    $region18: #{decoder_forward.1} parent=1 // pred_check
      _
    $region19: #{decoder_forward.1} parent=1 // pred_check_branch
      %20 = sbr.rel (0) target = $region21
    $region20: #{decoder_forward.1} parent=1 // pred_region
      _
    $region21: #{decoder_forward.1} parent=1 // pred_fallthru
      _
    %v22 = vld [vmem:[%s0] sm:$0xf]
    %v23 = vld [vmem:[%s0 + $0x4] sm:$0xf]
    %v24 = vld [vmem:[%s1] sm:$0xff]
    %v25 = vld [vmem:[%s1 + $0x8] sm:$0xff]
    %v26 = vld [vmem:[%s1 + $0x10] sm:$0xff]
    %v27 = vld [vmem:[%s1 + $0x18] sm:$0xff]
    %v28 = vld [vmem:[%s1 + $0x20] sm:$0x33]
    %v29 = vld [vmem:[%s1 + $0x28] sm:$0x33]
    %v30 = vld [vmem:[%s2] sm:$0xf]
    %v32 = vlaneseq
    %v33 = vshrl.u32 %v32, 7
    %v34 = vsub.s32 0, %v33
    %v35 = vrot.slane %v30, %v34
    %v36 = vlaneseq
    %v37 = vshrl.u32 %v36, 7
    %v38 = vsub.s32 1, %v37
    %v39 = vrot.slane %v30, %v38
    %v40 = vlaneseq
    %v41 = vshrl.u32 %v40, 7
    %v42 = vsub.s32 2, %v41
    %v43 = vrot.slane %v30, %v42
    %v44 = vlaneseq
    %v45 = vshrl.u32 %v44, 7
    %v46 = vsub.s32 3, %v45
    %v47 = vrot.slane %v30, %v46
    %v54 = vunpack.c.l.b16 %v22
    %v55 = vunpack.c.l.b16 %v23
    %v56 = vpack.c.b16 %v55, %v54
    %v63 = vunpack.c.l.b16 %v24
    %v64 = vunpack.c.h.b16 %v24
    %v65 = vunpack.c.l.b16 %v25
    %v66 = vunpack.c.h.b16 %v25
    %v67 = vunpack.c.l.b16 %v26
    %v68 = vunpack.c.h.b16 %v26
    %v69 = vunpack.c.l.b16 %v27
    %v70 = vunpack.c.h.b16 %v27
    %v71 = vunpack.c.l.b16 %v28
    %v72 = vunpack.c.h.b16 %v28
    %v73 = vunpack.c.l.b16 %v29
    %v74 = vunpack.c.h.b16 %v29
    %v75 = vpack.c.b16 %v67, %v63
    %v76 = vpack.c.b16 %v68, %v64
    %v77 = vpack.c.b16 %v69, %v65
    %v78 = vpack.c.b16 %v70, %v66
    %v79 = vpack.c.b16 %v71, %v71
    %v80 = vpack.c.b16 %v72, %v72
    %v81 = vpack.c.b16 %v73, %v73
    %v82 = vpack.c.b16 %v74, %v74
    %vm87 = vcmask 162816
    %v89 = vsel %vm87, %v56, 0
    %vm91 = vcmask 1041408
    %v93 = vsel %vm91, %v79, 0
    %v96 = vsel %vm91, %v80, 0
    %v99 = vsel %vm91, %v81, 0
    %v102 = vsel %vm91, %v82, 0
    %104 = vmatprep.subr.bf16.mxu0 %v76
    %105 = vmatpush1.bf16.msra.mxu0 %v75
    %106 = vmatprep.subr.bf16.mxu0 %v96
    %107 = vmatpush1.bf16.msra.mxu0 %v93
    %108 = vmatprep.subr.bf16.mxu0 0
    %109 = vmatpush1.bf16.msra.mxu0 0
    %110 = vmatprep.subr.bf16.mxu0 0
    %111 = vmatpush1.bf16.msra.mxu0 0
    %112 = vmatprep.subr.bf16.mxu0 0
    %113 = vmatpush1.bf16.msra.mxu0 0
    %114 = vmatprep.subr.bf16.mxu0 0
    %115 = vmatpush1.bf16.msra.mxu0 0
    %116 = vmatprep.subr.bf16.mxu0 0
    %117 = vmatpush1.bf16.msra.mxu0 0
    %118 = vmatprep.subr.bf16.mxu0 0
    %119 = vmatpush1.bf16.msra.mxu0 0
    %120 = vmatprep.subr.bf16.mxu0 0
    %121 = vmatpush1.bf16.msra.mxu0 0
    %122 = vmatprep.subr.bf16.mxu0 0
    %123 = vmatpush1.bf16.msra.mxu0 0
    %124 = vmatprep.subr.bf16.mxu0 0
    %125 = vmatpush1.bf16.msra.mxu0 0
    %126 = vmatprep.subr.bf16.mxu0 0
    %127 = vmatpush1.bf16.msra.mxu0 0
    %128 = vmatprep.subr.bf16.mxu0 0
    %129 = vmatpush1.bf16.msra.mxu0 0
    %130 = vmatprep.subr.bf16.mxu0 0
    %131 = vmatpush1.bf16.msra.mxu0 0
    %132 = vmatprep.subr.bf16.mxu0 0
    %133 = vmatpush1.bf16.msra.mxu0 0
    %134 = vmatprep.subr.bf16.mxu0 0
    %135 = vmatpush1.bf16.msra.mxu0 0
    %136 = vmatprep.mubr.bf16.mxu0 0
    %137 = vmatmul.mubr.bf16.gmra.mrb[0].mxu0 %v89
    %v138 = vpop.f32.mrb[0].mxu0
    %v139 = vadd.f32 %v35, %v138
    %v140 = vpop.f32.mrb[0].mxu0
    %v141 = vadd.f32 %v39, %v140
    %v142 = vpop.f32.mrb[0].mxu0
    %v143 = vadd.f32 %v35, %v142
    %v144 = vpop.f32.mrb[0].mxu0
    %v145 = vadd.f32 %v39, %v144
    %146 = vdwg.mxu0
    %147 = vmatprep.subr.bf16.mxu0 %v78
    %148 = vmatpush1.bf16.msra.mxu0 %v77
    %149 = vmatprep.subr.bf16.mxu0 %v102
    %150 = vmatpush1.bf16.msra.mxu0 %v99
    %151 = vmatprep.subr.bf16.mxu0 0
    %152 = vmatpush1.bf16.msra.mxu0 0
    %153 = vmatprep.subr.bf16.mxu0 0
    %154 = vmatpush1.bf16.msra.mxu0 0
    %155 = vmatprep.subr.bf16.mxu0 0
    %156 = vmatpush1.bf16.msra.mxu0 0
    %157 = vmatprep.subr.bf16.mxu0 0
    %158 = vmatpush1.bf16.msra.mxu0 0
    %159 = vmatprep.subr.bf16.mxu0 0
    %160 = vmatpush1.bf16.msra.mxu0 0
    %161 = vmatprep.subr.bf16.mxu0 0
    %162 = vmatpush1.bf16.msra.mxu0 0
    %163 = vmatprep.subr.bf16.mxu0 0
    %164 = vmatpush1.bf16.msra.mxu0 0
    %165 = vmatprep.subr.bf16.mxu0 0
    %166 = vmatpush1.bf16.msra.mxu0 0
    %167 = vmatprep.subr.bf16.mxu0 0
    %168 = vmatpush1.bf16.msra.mxu0 0
    %169 = vmatprep.subr.bf16.mxu0 0
    %170 = vmatpush1.bf16.msra.mxu0 0
    %171 = vmatprep.subr.bf16.mxu0 0
    %172 = vmatpush1.bf16.msra.mxu0 0
    %173 = vmatprep.subr.bf16.mxu0 0
    %174 = vmatpush1.bf16.msra.mxu0 0
    %175 = vmatprep.subr.bf16.mxu0 0
    %176 = vmatpush1.bf16.msra.mxu0 0
    %177 = vmatprep.subr.bf16.mxu0 0
    %178 = vmatpush1.bf16.msra.mxu0 0
    %179 = vmatprep.mubr.bf16.mxu0 0
    %180 = vmatmul.mubr.bf16.gmra.mrb[0].mxu0 %v89
    %v181 = vpop.f32.mrb[0].mxu0
    %v182 = vadd.f32 %v43, %v181
    %v183 = vpop.f32.mrb[0].mxu0
    %v184 = vadd.f32 %v47, %v183
    %v185 = vpop.f32.mrb[0].mxu0
    %v186 = vadd.f32 %v43, %v185
    %v187 = vpop.f32.mrb[0].mxu0
    %v188 = vadd.f32 %v47, %v187
    %189 = vdwg.mxu0
    %v190 = vmax.f32 %v139, 0.0
    %v191 = vmax.f32 %v141, 0.0
    %v192 = vmax.f32 %v182, 0.0
    %v193 = vmax.f32 %v184, 0.0
    %v194 = vmax.f32 %v143, 0.0
    %v195 = vmax.f32 %v145, 0.0
    %v196 = vmax.f32 %v186, 0.0
    %v197 = vmax.f32 %v188, 0.0
    %v198 = vpack.c.bf16 %v194, %v190
    %v199 = vpack.c.bf16 %v195, %v191
    %v200 = vpack.c.bf16 %v196, %v192
    %v201 = vpack.c.bf16 %v197, %v193
    %v202 = vld [vmem:[%s3] sm:$0xff]
    %v203 = vld [vmem:[%s3 + $0x8] sm:$0xff]
    %v204 = vld [vmem:[%s3 + $0x10] sm:$0xff]
    %v205 = vld [vmem:[%s3 + $0x18] sm:$0xf]
    %v206 = vld [vmem:[%s3 + $0x1c] sm:$0xff]
    %v207 = vld [vmem:[%s3 + $0x24] sm:$0xff]
    %v208 = vld [vmem:[%s3 + $0x2c] sm:$0xff]
    %v209 = vld [vmem:[%s3 + $0x34] sm:$0xf]
    %v210 = vld [vmem:[%s3 + $0x38] sm:$0xff]
    %v211 = vld [vmem:[%s3 + $0x40] sm:$0xff]
    %v212 = vld [vmem:[%s3 + $0x48] sm:$0xff]
    %v213 = vld [vmem:[%s3 + $0x50] sm:$0xf]
    %v214 = vld [vmem:[%s3 + $0x54] sm:$0xff]
    %v215 = vld [vmem:[%s3 + $0x5c] sm:$0xff]
    %v216 = vld [vmem:[%s3 + $0x64] sm:$0xff]
    %v217 = vld [vmem:[%s3 + $0x6c] sm:$0xf]
    %v218 = vld [vmem:[%s3 + $0x70] sm:$0xff]
    %v219 = vld [vmem:[%s3 + $0x78] sm:$0xff]
    %v220 = vld [vmem:[%s3 + $0x80] sm:$0xff]
    %v221 = vld [vmem:[%s3 + $0x88] sm:$0xf]
    %v222 = vld [vmem:[%s3 + $0x8c] sm:$0xff]
    %v223 = vld [vmem:[%s3 + $0x94] sm:$0xff]
    %v224 = vld [vmem:[%s3 + $0x9c] sm:$0xff]
    %v225 = vld [vmem:[%s3 + $0xa4] sm:$0xf]
    %v226 = vld [vmem:[%s3 + $0xa8] sm:$0xff]
    %v227 = vld [vmem:[%s3 + $0xb0] sm:$0xff]
    %v228 = vld [vmem:[%s3 + $0xb8] sm:$0xff]
    %v229 = vld [vmem:[%s3 + $0xc0] sm:$0xf]
    %v230 = vld [vmem:[%s3 + $0xc4] sm:$0xff]
    %v231 = vld [vmem:[%s3 + $0xcc] sm:$0xff]
    %v232 = vld [vmem:[%s3 + $0xd4] sm:$0xff]
    %v233 = vld [vmem:[%s3 + $0xdc] sm:$0xf]
    %v234 = vld [vmem:[%s3 + $0xe0] sm:$0xff]
    %v235 = vld [vmem:[%s3 + $0xe8] sm:$0xff]
    %v236 = vld [vmem:[%s3 + $0xf0] sm:$0xff]
    %v237 = vld [vmem:[%s3 + $0xf8] sm:$0xf]
    %v238 = vld [vmem:[%s3 + $0xfc] sm:$0xff]
    %v239 = vld [vmem:[%s3 + $0x104] sm:$0xff]
    %v240 = vld [vmem:[%s3 + $0x10c] sm:$0xff]
    %v241 = vld [vmem:[%s3 + $0x114] sm:$0xf]
    %v242 = vld [vmem:[%s3 + $0x118] sm:$0xff]
    %v243 = vld [vmem:[%s3 + $0x120] sm:$0xff]
    %v244 = vld [vmem:[%s3 + $0x128] sm:$0xff]
    %v245 = vld [vmem:[%s3 + $0x130] sm:$0xf]
    %v246 = vld [vmem:[%s3 + $0x134] sm:$0xff]
    %v247 = vld [vmem:[%s3 + $0x13c] sm:$0xff]
    %v248 = vld [vmem:[%s3 + $0x144] sm:$0xff]
    %v249 = vld [vmem:[%s3 + $0x14c] sm:$0xf]
    %v250 = vld [vmem:[%s3 + $0x150] sm:$0xff]
    %v251 = vld [vmem:[%s3 + $0x158] sm:$0xff]
    %v252 = vld [vmem:[%s3 + $0x160] sm:$0xff]
    %v253 = vld [vmem:[%s3 + $0x168] sm:$0xf]
    %v254 = vld [vmem:[%s3 + $0x16c] sm:$0xff]
    %v255 = vld [vmem:[%s3 + $0x174] sm:$0xff]
    %v256 = vld [vmem:[%s3 + $0x17c] sm:$0xff]
    %v257 = vld [vmem:[%s3 + $0x184] sm:$0xf]
    %v258 = vld [vmem:[%s3 + $0x188] sm:$0xff]
    %v259 = vld [vmem:[%s3 + $0x190] sm:$0xff]
    %v260 = vld [vmem:[%s3 + $0x198] sm:$0xff]
    %v261 = vld [vmem:[%s3 + $0x1a0] sm:$0xf]
    %v262 = vld [vmem:[%s3 + $0x1a4] sm:$0xff]
    %v263 = vld [vmem:[%s3 + $0x1ac] sm:$0xff]
    %v264 = vld [vmem:[%s3 + $0x1b4] sm:$0xff]
    %v265 = vld [vmem:[%s3 + $0x1bc] sm:$0xf]
    %v266 = vld [vmem:[%s3 + $0x1c0] sm:$0xff]
    %v267 = vld [vmem:[%s3 + $0x1c8] sm:$0xff]
    %v268 = vld [vmem:[%s3 + $0x1d0] sm:$0xff]
    %v269 = vld [vmem:[%s3 + $0x1d8] sm:$0xf]
    %v270 = vld [vmem:[%s3 + $0x1dc] sm:$0xff]
    %v271 = vld [vmem:[%s3 + $0x1e4] sm:$0xff]
    %v272 = vld [vmem:[%s3 + $0x1ec] sm:$0xff]
    %v273 = vld [vmem:[%s3 + $0x1f4] sm:$0xf]
    %v274 = vld [vmem:[%s3 + $0x1f8] sm:$0xff]
    %v275 = vld [vmem:[%s3 + $0x200] sm:$0xff]
    %v276 = vld [vmem:[%s3 + $0x208] sm:$0xff]
    %v277 = vld [vmem:[%s3 + $0x210] sm:$0xf]
    %v278 = vld [vmem:[%s3 + $0x214] sm:$0xff]
    %v279 = vld [vmem:[%s3 + $0x21c] sm:$0xff]
    %v280 = vld [vmem:[%s3 + $0x224] sm:$0xff]
    %v281 = vld [vmem:[%s3 + $0x22c] sm:$0xf]
    %v282 = vld [vmem:[%s3 + $0x230] sm:$0xff]
    %v283 = vld [vmem:[%s3 + $0x238] sm:$0xff]
    %v284 = vld [vmem:[%s3 + $0x240] sm:$0xff]
    %v285 = vld [vmem:[%s3 + $0x248] sm:$0xf]
    %v286 = vld [vmem:[%s3 + $0x24c] sm:$0xff]
    %v287 = vld [vmem:[%s3 + $0x254] sm:$0xff]
    %v288 = vld [vmem:[%s3 + $0x25c] sm:$0xff]
    %v289 = vld [vmem:[%s3 + $0x264] sm:$0xf]
    %v290 = vld [vmem:[%s3 + $0x268] sm:$0xff]
    %v291 = vld [vmem:[%s3 + $0x270] sm:$0xff]
    %v292 = vld [vmem:[%s3 + $0x278] sm:$0xff]
    %v293 = vld [vmem:[%s3 + $0x280] sm:$0xf]
    %v294 = vld [vmem:[%s3 + $0x284] sm:$0xff]
    %v295 = vld [vmem:[%s3 + $0x28c] sm:$0xff]
    %v296 = vld [vmem:[%s3 + $0x294] sm:$0xff]
    %v297 = vld [vmem:[%s3 + $0x29c] sm:$0xf]
    %v298 = vld [vmem:[%s3 + $0x2a0] sm:$0xff]
    %v299 = vld [vmem:[%s3 + $0x2a8] sm:$0xff]
    %v300 = vld [vmem:[%s3 + $0x2b0] sm:$0xff]
    %v301 = vld [vmem:[%s3 + $0x2b8] sm:$0xf]
    %v302 = vld [vmem:[%s3 + $0x2bc] sm:$0xff]
    %v303 = vld [vmem:[%s3 + $0x2c4] sm:$0xff]
    %v304 = vld [vmem:[%s3 + $0x2cc] sm:$0xff]
    %v305 = vld [vmem:[%s3 + $0x2d4] sm:$0xf]
    %v306 = vld [vmem:[%s3 + $0x2d8] sm:$0xff]
    %v307 = vld [vmem:[%s3 + $0x2e0] sm:$0xff]
    %v308 = vld [vmem:[%s3 + $0x2e8] sm:$0xff]
    %v309 = vld [vmem:[%s3 + $0x2f0] sm:$0xf]
    %v310 = vld [vmem:[%s3 + $0x2f4] sm:$0xff]
    %v311 = vld [vmem:[%s3 + $0x2fc] sm:$0xff]
    %v312 = vld [vmem:[%s3 + $0x304] sm:$0xff]
    %v313 = vld [vmem:[%s3 + $0x30c] sm:$0xf]
    %v314 = vld [vmem:[%s3 + $0x310] sm:$0xff]
    %v315 = vld [vmem:[%s3 + $0x318] sm:$0xff]
    %v316 = vld [vmem:[%s3 + $0x320] sm:$0xff]
    %v317 = vld [vmem:[%s3 + $0x328] sm:$0xf]
    %v318 = vld [vmem:[%s3 + $0x32c] sm:$0xff]
    %v319 = vld [vmem:[%s3 + $0x334] sm:$0xff]
    %v320 = vld [vmem:[%s3 + $0x33c] sm:$0xff]
    %v321 = vld [vmem:[%s3 + $0x344] sm:$0xf]
    %v322 = vld [vmem:[%s3 + $0x348] sm:$0xff]
    %v323 = vld [vmem:[%s3 + $0x350] sm:$0xff]
    %v324 = vld [vmem:[%s3 + $0x358] sm:$0xff]
    %v325 = vld [vmem:[%s3 + $0x360] sm:$0xf]
    %v326 = vld [vmem:[%s3 + $0x364] sm:$0xff]
    %v327 = vld [vmem:[%s3 + $0x36c] sm:$0xff]
    %v328 = vld [vmem:[%s3 + $0x374] sm:$0xff]
    %v329 = vld [vmem:[%s3 + $0x37c] sm:$0xf]
    %v330 = vld [vmem:[%s3 + $0x380] sm:$0xff]
    %v331 = vld [vmem:[%s3 + $0x388] sm:$0xff]
    %v332 = vld [vmem:[%s3 + $0x390] sm:$0xff]
    %v333 = vld [vmem:[%s3 + $0x398] sm:$0xf]
    %v334 = vld [vmem:[%s3 + $0x39c] sm:$0xff]
    %v335 = vld [vmem:[%s3 + $0x3a4] sm:$0xff]
    %v336 = vld [vmem:[%s3 + $0x3ac] sm:$0xff]
    %v337 = vld [vmem:[%s3 + $0x3b4] sm:$0xf]
    %v338 = vld [vmem:[%s3 + $0x3b8] sm:$0xff]
    %v339 = vld [vmem:[%s3 + $0x3c0] sm:$0xff]
    %v340 = vld [vmem:[%s3 + $0x3c8] sm:$0xff]
    %v341 = vld [vmem:[%s3 + $0x3d0] sm:$0xf]
    %v342 = vld [vmem:[%s3 + $0x3d4] sm:$0xff]
    %v343 = vld [vmem:[%s3 + $0x3dc] sm:$0xff]
    %v344 = vld [vmem:[%s3 + $0x3e4] sm:$0xff]
    %v345 = vld [vmem:[%s3 + $0x3ec] sm:$0xf]
    %v346 = vld [vmem:[%s3 + $0x3f0] sm:$0xff]
    %v347 = vld [vmem:[%s3 + $0x3f8] sm:$0xff]
    %v348 = vld [vmem:[%s3 + $0x400] sm:$0xff]
    %v349 = vld [vmem:[%s3 + $0x408] sm:$0xf]
    %v350 = vld [vmem:[%s3 + $0x40c] sm:$0xff]
    %v351 = vld [vmem:[%s3 + $0x414] sm:$0xff]
    %v352 = vld [vmem:[%s3 + $0x41c] sm:$0xff]
    %v353 = vld [vmem:[%s3 + $0x424] sm:$0xf]
    %v354 = vld [vmem:[%s3 + $0x428] sm:$0xff]
    %v355 = vld [vmem:[%s3 + $0x430] sm:$0xff]
    %v356 = vld [vmem:[%s3 + $0x438] sm:$0xff]
    %v357 = vld [vmem:[%s3 + $0x440] sm:$0xf]
    %v358 = vld [vmem:[%s3 + $0x444] sm:$0xff]
    %v359 = vld [vmem:[%s3 + $0x44c] sm:$0xff]
    %v360 = vld [vmem:[%s3 + $0x454] sm:$0xff]
    %v361 = vld [vmem:[%s3 + $0x45c] sm:$0xf]
    %v362 = vld [vmem:[%s3 + $0x460] sm:$0xff]
    %v363 = vld [vmem:[%s3 + $0x468] sm:$0xff]
    %v364 = vld [vmem:[%s3 + $0x470] sm:$0xff]
    %v365 = vld [vmem:[%s3 + $0x478] sm:$0xf]
    %v366 = vld [vmem:[%s3 + $0x47c] sm:$0xff]
    %v367 = vld [vmem:[%s3 + $0x484] sm:$0xff]
    %v368 = vld [vmem:[%s3 + $0x48c] sm:$0xff]
    %v369 = vld [vmem:[%s3 + $0x494] sm:$0xf]
    %v370 = vld [vmem:[%s3 + $0x498] sm:$0xff]
    %v371 = vld [vmem:[%s3 + $0x4a0] sm:$0xff]
    %v372 = vld [vmem:[%s3 + $0x4a8] sm:$0xff]
    %v373 = vld [vmem:[%s3 + $0x4b0] sm:$0xf]
    %v374 = vld [vmem:[%s3 + $0x4b4] sm:$0xff]
    %v375 = vld [vmem:[%s3 + $0x4bc] sm:$0xff]
    %v376 = vld [vmem:[%s3 + $0x4c4] sm:$0xff]
    %v377 = vld [vmem:[%s3 + $0x4cc] sm:$0xf]
    %v378 = vld [vmem:[%s3 + $0x4d0] sm:$0xff]
    %v379 = vld [vmem:[%s3 + $0x4d8] sm:$0xff]
    %v380 = vld [vmem:[%s3 + $0x4e0] sm:$0xff]
    %v381 = vld [vmem:[%s3 + $0x4e8] sm:$0xf]
    %v382 = vld [vmem:[%s3 + $0x4ec] sm:$0xff]
    %v383 = vld [vmem:[%s3 + $0x4f4] sm:$0xff]
    %v384 = vld [vmem:[%s3 + $0x4fc] sm:$0xff]
    %v385 = vld [vmem:[%s3 + $0x504] sm:$0xf]
    %v386 = vld [vmem:[%s3 + $0x508] sm:$0xff]
    %v387 = vld [vmem:[%s3 + $0x510] sm:$0xff]
    %v388 = vld [vmem:[%s3 + $0x518] sm:$0xff]
    %v389 = vld [vmem:[%s3 + $0x520] sm:$0xf]
    %v390 = vld [vmem:[%s3 + $0x524] sm:$0xff]
    %v391 = vld [vmem:[%s3 + $0x52c] sm:$0xff]
    %v392 = vld [vmem:[%s3 + $0x534] sm:$0xff]
    %v393 = vld [vmem:[%s3 + $0x53c] sm:$0xf]
    %v394 = vld [vmem:[%s3 + $0x540] sm:$0xff]
    %v395 = vld [vmem:[%s3 + $0x548] sm:$0xff]
    %v396 = vld [vmem:[%s3 + $0x550] sm:$0xff]
    %v397 = vld [vmem:[%s3 + $0x558] sm:$0xf]
    %v398 = vld [vmem:[%s3 + $0x55c] sm:$0xff]
    %v399 = vld [vmem:[%s3 + $0x564] sm:$0xff]
    %v400 = vld [vmem:[%s3 + $0x56c] sm:$0xff]
    %v401 = vld [vmem:[%s3 + $0x574] sm:$0xf]
    %v402 = vld [vmem:[%s3 + $0x578] sm:$0xff]
    %v403 = vld [vmem:[%s3 + $0x580] sm:$0xff]
    %v404 = vld [vmem:[%s3 + $0x588] sm:$0xff]
    %v405 = vld [vmem:[%s3 + $0x590] sm:$0xf]
    %v406 = vld [vmem:[%s3 + $0x594] sm:$0xff]
    %v407 = vld [vmem:[%s3 + $0x59c] sm:$0xff]
    %v408 = vld [vmem:[%s3 + $0x5a4] sm:$0xff]
    %v409 = vld [vmem:[%s3 + $0x5ac] sm:$0xf]
    %v410 = vld [vmem:[%s3 + $0x5b0] sm:$0xff]
    %v411 = vld [vmem:[%s3 + $0x5b8] sm:$0xff]
    %v412 = vld [vmem:[%s3 + $0x5c0] sm:$0xff]
    %v413 = vld [vmem:[%s3 + $0x5c8] sm:$0xf]
    %v414 = vld [vmem:[%s3 + $0x5cc] sm:$0xff]
    %v415 = vld [vmem:[%s3 + $0x5d4] sm:$0xff]
    %v416 = vld [vmem:[%s3 + $0x5dc] sm:$0xff]
    %v417 = vld [vmem:[%s3 + $0x5e4] sm:$0xf]
    %v418 = vld [vmem:[%s3 + $0x5e8] sm:$0xff]
    %v419 = vld [vmem:[%s3 + $0x5f0] sm:$0xff]
    %v420 = vld [vmem:[%s3 + $0x5f8] sm:$0xff]
    %v421 = vld [vmem:[%s3 + $0x600] sm:$0xf]
    %v422 = vld [vmem:[%s3 + $0x604] sm:$0xff]
    %v423 = vld [vmem:[%s3 + $0x60c] sm:$0xff]
    %v424 = vld [vmem:[%s3 + $0x614] sm:$0xff]
    %v425 = vld [vmem:[%s3 + $0x61c] sm:$0xf]
    %v426 = vld [vmem:[%s3 + $0x620] sm:$0xff]
    %v427 = vld [vmem:[%s3 + $0x628] sm:$0xff]
    %v428 = vld [vmem:[%s3 + $0x630] sm:$0xff]
    %v429 = vld [vmem:[%s3 + $0x638] sm:$0xf]
    %v430 = vld [vmem:[%s3 + $0x63c] sm:$0xff]
    %v431 = vld [vmem:[%s3 + $0x644] sm:$0xff]
    %v432 = vld [vmem:[%s3 + $0x64c] sm:$0xff]
    %v433 = vld [vmem:[%s3 + $0x654] sm:$0xf]
    %v434 = vld [vmem:[%s3 + $0x658] sm:$0xff]
    %v435 = vld [vmem:[%s3 + $0x660] sm:$0xff]
    %v436 = vld [vmem:[%s3 + $0x668] sm:$0xff]
    %v437 = vld [vmem:[%s3 + $0x670] sm:$0xf]
    %v438 = vld [vmem:[%s3 + $0x674] sm:$0xff]
    %v439 = vld [vmem:[%s3 + $0x67c] sm:$0xff]
    %v440 = vld [vmem:[%s3 + $0x684] sm:$0xff]
    %v441 = vld [vmem:[%s3 + $0x68c] sm:$0xf]
    %v442 = vld [vmem:[%s3 + $0x690] sm:$0xff]
    %v443 = vld [vmem:[%s3 + $0x698] sm:$0xff]
    %v444 = vld [vmem:[%s3 + $0x6a0] sm:$0xff]
    %v445 = vld [vmem:[%s3 + $0x6a8] sm:$0xf]
    %v446 = vld [vmem:[%s3 + $0x6ac] sm:$0xff]
    %v447 = vld [vmem:[%s3 + $0x6b4] sm:$0xff]
    %v448 = vld [vmem:[%s3 + $0x6bc] sm:$0xff]
    %v449 = vld [vmem:[%s3 + $0x6c4] sm:$0xf]
    %v450 = vld [vmem:[%s3 + $0x6c8] sm:$0xff]
    %v451 = vld [vmem:[%s3 + $0x6d0] sm:$0xff]
    %v452 = vld [vmem:[%s3 + $0x6d8] sm:$0xff]
    %v453 = vld [vmem:[%s3 + $0x6e0] sm:$0xf]
    %v454 = vld [vmem:[%s3 + $0x6e4] sm:$0xff]
    %v455 = vld [vmem:[%s3 + $0x6ec] sm:$0xff]
    %v456 = vld [vmem:[%s3 + $0x6f4] sm:$0xff]
    %v457 = vld [vmem:[%s3 + $0x6fc] sm:$0xf]
    %v458 = vld [vmem:[%s4] sm:$0xff]
    %v460 = vlaneseq
    %v461 = vshrl.u32 %v460, 7
    %v462 = vsub.s32 0, %v461
    %v463 = vrot.slane %v458, %v462
    %v464 = vlaneseq
    %v465 = vshrl.u32 %v464, 7
    %v466 = vsub.s32 1, %v465
    %v467 = vrot.slane %v458, %v466
    %v468 = vlaneseq
    %v469 = vshrl.u32 %v468, 7
    %v470 = vsub.s32 2, %v469
    %v471 = vrot.slane %v458, %v470
    %v472 = vlaneseq
    %v473 = vshrl.u32 %v472, 7
    %v474 = vsub.s32 3, %v473
    %v475 = vrot.slane %v458, %v474
    %v476 = vlaneseq
    %v477 = vshrl.u32 %v476, 7
    %v478 = vsub.s32 4, %v477
    %v479 = vrot.slane %v458, %v478
    %v480 = vlaneseq
    %v481 = vshrl.u32 %v480, 7
    %v482 = vsub.s32 5, %v481
    %v483 = vrot.slane %v458, %v482
    %v484 = vlaneseq
    %v485 = vshrl.u32 %v484, 7
    %v486 = vsub.s32 6, %v485
    %v487 = vrot.slane %v458, %v486
    %v751 = vunpack.c.l.b16 %v202
    %v752 = vunpack.c.h.b16 %v202
    %v753 = vunpack.c.l.b16 %v203
    %v754 = vunpack.c.h.b16 %v203
    %v755 = vunpack.c.l.b16 %v204
    %v756 = vunpack.c.h.b16 %v204
    %v757 = vunpack.c.l.b16 %v205
    %v758 = vunpack.c.l.b16 %v206
    %v759 = vunpack.c.h.b16 %v206
    %v760 = vunpack.c.l.b16 %v207
    %v761 = vunpack.c.h.b16 %v207
    %v762 = vunpack.c.l.b16 %v208
    %v763 = vunpack.c.h.b16 %v208
    %v764 = vunpack.c.l.b16 %v209
    %v765 = vunpack.c.l.b16 %v210
    %v766 = vunpack.c.h.b16 %v210
    %v767 = vunpack.c.l.b16 %v211
    %v768 = vunpack.c.h.b16 %v211
    %v769 = vunpack.c.l.b16 %v212
    %v770 = vunpack.c.h.b16 %v212
    %v771 = vunpack.c.l.b16 %v213
    %v772 = vunpack.c.l.b16 %v214
    %v773 = vunpack.c.h.b16 %v214
    %v774 = vunpack.c.l.b16 %v215
    %v775 = vunpack.c.h.b16 %v215
    %v776 = vunpack.c.l.b16 %v216
    %v777 = vunpack.c.h.b16 %v216
    %v778 = vunpack.c.l.b16 %v217
    %v779 = vunpack.c.l.b16 %v218
    %v780 = vunpack.c.h.b16 %v218
    %v781 = vunpack.c.l.b16 %v219
    %v782 = vunpack.c.h.b16 %v219
    %v783 = vunpack.c.l.b16 %v220
    %v784 = vunpack.c.h.b16 %v220
    %v785 = vunpack.c.l.b16 %v221
    %v786 = vunpack.c.l.b16 %v222
    %v787 = vunpack.c.h.b16 %v222
    %v788 = vunpack.c.l.b16 %v223
    %v789 = vunpack.c.h.b16 %v223
    %v790 = vunpack.c.l.b16 %v224
    %v791 = vunpack.c.h.b16 %v224
    %v792 = vunpack.c.l.b16 %v225
    %v793 = vunpack.c.l.b16 %v226
    %v794 = vunpack.c.h.b16 %v226
    %v795 = vunpack.c.l.b16 %v227
    %v796 = vunpack.c.h.b16 %v227
    %v797 = vunpack.c.l.b16 %v228
    %v798 = vunpack.c.h.b16 %v228
    %v799 = vunpack.c.l.b16 %v229
    %v800 = vunpack.c.l.b16 %v230
    %v801 = vunpack.c.h.b16 %v230
    %v802 = vunpack.c.l.b16 %v231
    %v803 = vunpack.c.h.b16 %v231
    %v804 = vunpack.c.l.b16 %v232
    %v805 = vunpack.c.h.b16 %v232
    %v806 = vunpack.c.l.b16 %v233
    %v807 = vunpack.c.l.b16 %v234
    %v808 = vunpack.c.h.b16 %v234
    %v809 = vunpack.c.l.b16 %v235
    %v810 = vunpack.c.h.b16 %v235
    %v811 = vunpack.c.l.b16 %v236
    %v812 = vunpack.c.h.b16 %v236
    %v813 = vunpack.c.l.b16 %v237
    %v814 = vunpack.c.l.b16 %v238
    %v815 = vunpack.c.h.b16 %v238
    %v816 = vunpack.c.l.b16 %v239
    %v817 = vunpack.c.h.b16 %v239
    %v818 = vunpack.c.l.b16 %v240
    %v819 = vunpack.c.h.b16 %v240
    %v820 = vunpack.c.l.b16 %v241
    %v821 = vunpack.c.l.b16 %v242
    %v822 = vunpack.c.h.b16 %v242
    %v823 = vunpack.c.l.b16 %v243
    %v824 = vunpack.c.h.b16 %v243
    %v825 = vunpack.c.l.b16 %v244
    %v826 = vunpack.c.h.b16 %v244
    %v827 = vunpack.c.l.b16 %v245
    %v828 = vunpack.c.l.b16 %v246
    %v829 = vunpack.c.h.b16 %v246
    %v830 = vunpack.c.l.b16 %v247
    %v831 = vunpack.c.h.b16 %v247
    %v832 = vunpack.c.l.b16 %v248
    %v833 = vunpack.c.h.b16 %v248
    %v834 = vunpack.c.l.b16 %v249
    %v835 = vunpack.c.l.b16 %v250
    %v836 = vunpack.c.h.b16 %v250
    %v837 = vunpack.c.l.b16 %v251
    %v838 = vunpack.c.h.b16 %v251
    %v839 = vunpack.c.l.b16 %v252
    %v840 = vunpack.c.h.b16 %v252
    %v841 = vunpack.c.l.b16 %v253
    %v842 = vunpack.c.l.b16 %v254
    %v843 = vunpack.c.h.b16 %v254
    %v844 = vunpack.c.l.b16 %v255
    %v845 = vunpack.c.h.b16 %v255
    %v846 = vunpack.c.l.b16 %v256
    %v847 = vunpack.c.h.b16 %v256
    %v848 = vunpack.c.l.b16 %v257
    %v849 = vunpack.c.l.b16 %v258
    %v850 = vunpack.c.h.b16 %v258
    %v851 = vunpack.c.l.b16 %v259
    %v852 = vunpack.c.h.b16 %v259
    %v853 = vunpack.c.l.b16 %v260
    %v854 = vunpack.c.h.b16 %v260
    %v855 = vunpack.c.l.b16 %v261
    %v856 = vunpack.c.l.b16 %v262
    %v857 = vunpack.c.h.b16 %v262
    %v858 = vunpack.c.l.b16 %v263
    %v859 = vunpack.c.h.b16 %v263
    %v860 = vunpack.c.l.b16 %v264
    %v861 = vunpack.c.h.b16 %v264
    %v862 = vunpack.c.l.b16 %v265
    %v863 = vunpack.c.l.b16 %v266
    %v864 = vunpack.c.h.b16 %v266
    %v865 = vunpack.c.l.b16 %v267
    %v866 = vunpack.c.h.b16 %v267
    %v867 = vunpack.c.l.b16 %v268
    %v868 = vunpack.c.h.b16 %v268
    %v869 = vunpack.c.l.b16 %v269
    %v870 = vunpack.c.l.b16 %v270
    %v871 = vunpack.c.h.b16 %v270
    %v872 = vunpack.c.l.b16 %v271
    %v873 = vunpack.c.h.b16 %v271
    %v874 = vunpack.c.l.b16 %v272
    %v875 = vunpack.c.h.b16 %v272
    %v876 = vunpack.c.l.b16 %v273
    %v877 = vunpack.c.l.b16 %v274
    %v878 = vunpack.c.h.b16 %v274
    %v879 = vunpack.c.l.b16 %v275
    %v880 = vunpack.c.h.b16 %v275
    %v881 = vunpack.c.l.b16 %v276
    %v882 = vunpack.c.h.b16 %v276
    %v883 = vunpack.c.l.b16 %v277
    %v884 = vunpack.c.l.b16 %v278
    %v885 = vunpack.c.h.b16 %v278
    %v886 = vunpack.c.l.b16 %v279
    %v887 = vunpack.c.h.b16 %v279
    %v888 = vunpack.c.l.b16 %v280
    %v889 = vunpack.c.h.b16 %v280
    %v890 = vunpack.c.l.b16 %v281
    %v891 = vunpack.c.l.b16 %v282
    %v892 = vunpack.c.h.b16 %v282
    %v893 = vunpack.c.l.b16 %v283
    %v894 = vunpack.c.h.b16 %v283
    %v895 = vunpack.c.l.b16 %v284
    %v896 = vunpack.c.h.b16 %v284
    %v897 = vunpack.c.l.b16 %v285
    %v898 = vunpack.c.l.b16 %v286
    %v899 = vunpack.c.h.b16 %v286
    %v900 = vunpack.c.l.b16 %v287
    %v901 = vunpack.c.h.b16 %v287
    %v902 = vunpack.c.l.b16 %v288
    %v903 = vunpack.c.h.b16 %v288
    %v904 = vunpack.c.l.b16 %v289
    %v905 = vunpack.c.l.b16 %v290
    %v906 = vunpack.c.h.b16 %v290
    %v907 = vunpack.c.l.b16 %v291
    %v908 = vunpack.c.h.b16 %v291
    %v909 = vunpack.c.l.b16 %v292
    %v910 = vunpack.c.h.b16 %v292
    %v911 = vunpack.c.l.b16 %v293
    %v912 = vunpack.c.l.b16 %v294
    %v913 = vunpack.c.h.b16 %v294
    %v914 = vunpack.c.l.b16 %v295
    %v915 = vunpack.c.h.b16 %v295
    %v916 = vunpack.c.l.b16 %v296
    %v917 = vunpack.c.h.b16 %v296
    %v918 = vunpack.c.l.b16 %v297
    %v919 = vunpack.c.l.b16 %v298
    %v920 = vunpack.c.h.b16 %v298
    %v921 = vunpack.c.l.b16 %v299
    %v922 = vunpack.c.h.b16 %v299
    %v923 = vunpack.c.l.b16 %v300
    %v924 = vunpack.c.h.b16 %v300
    %v925 = vunpack.c.l.b16 %v301
    %v926 = vunpack.c.l.b16 %v302
    %v927 = vunpack.c.h.b16 %v302
    %v928 = vunpack.c.l.b16 %v303
    %v929 = vunpack.c.h.b16 %v303
    %v930 = vunpack.c.l.b16 %v304
    %v931 = vunpack.c.h.b16 %v304
    %v932 = vunpack.c.l.b16 %v305
    %v933 = vunpack.c.l.b16 %v306
    %v934 = vunpack.c.h.b16 %v306
    %v935 = vunpack.c.l.b16 %v307
    %v936 = vunpack.c.h.b16 %v307
    %v937 = vunpack.c.l.b16 %v308
    %v938 = vunpack.c.h.b16 %v308
    %v939 = vunpack.c.l.b16 %v309
    %v940 = vunpack.c.l.b16 %v310
    %v941 = vunpack.c.h.b16 %v310
    %v942 = vunpack.c.l.b16 %v311
    %v943 = vunpack.c.h.b16 %v311
    %v944 = vunpack.c.l.b16 %v312
    %v945 = vunpack.c.h.b16 %v312
    %v946 = vunpack.c.l.b16 %v313
    %v947 = vunpack.c.l.b16 %v314
    %v948 = vunpack.c.h.b16 %v314
    %v949 = vunpack.c.l.b16 %v315
    %v950 = vunpack.c.h.b16 %v315
    %v951 = vunpack.c.l.b16 %v316
    %v952 = vunpack.c.h.b16 %v316
    %v953 = vunpack.c.l.b16 %v317
    %v954 = vunpack.c.l.b16 %v318
    %v955 = vunpack.c.h.b16 %v318
    %v956 = vunpack.c.l.b16 %v319
    %v957 = vunpack.c.h.b16 %v319
    %v958 = vunpack.c.l.b16 %v320
    %v959 = vunpack.c.h.b16 %v320
    %v960 = vunpack.c.l.b16 %v321
    %v961 = vunpack.c.l.b16 %v322
    %v962 = vunpack.c.h.b16 %v322
    %v963 = vunpack.c.l.b16 %v323
    %v964 = vunpack.c.h.b16 %v323
    %v965 = vunpack.c.l.b16 %v324
    %v966 = vunpack.c.h.b16 %v324
    %v967 = vunpack.c.l.b16 %v325
    %v968 = vunpack.c.l.b16 %v326
    %v969 = vunpack.c.h.b16 %v326
    %v970 = vunpack.c.l.b16 %v327
    %v971 = vunpack.c.h.b16 %v327
    %v972 = vunpack.c.l.b16 %v328
    %v973 = vunpack.c.h.b16 %v328
    %v974 = vunpack.c.l.b16 %v329
    %v975 = vunpack.c.l.b16 %v330
    %v976 = vunpack.c.h.b16 %v330
    %v977 = vunpack.c.l.b16 %v331
    %v978 = vunpack.c.h.b16 %v331
    %v979 = vunpack.c.l.b16 %v332
    %v980 = vunpack.c.h.b16 %v332
    %v981 = vunpack.c.l.b16 %v333
    %v982 = vunpack.c.l.b16 %v334
    %v983 = vunpack.c.h.b16 %v334
    %v984 = vunpack.c.l.b16 %v335
    %v985 = vunpack.c.h.b16 %v335
    %v986 = vunpack.c.l.b16 %v336
    %v987 = vunpack.c.h.b16 %v336
    %v988 = vunpack.c.l.b16 %v337
    %v989 = vunpack.c.l.b16 %v338
    %v990 = vunpack.c.h.b16 %v338
    %v991 = vunpack.c.l.b16 %v339
    %v992 = vunpack.c.h.b16 %v339
    %v993 = vunpack.c.l.b16 %v340
    %v994 = vunpack.c.h.b16 %v340
    %v995 = vunpack.c.l.b16 %v341
    %v996 = vunpack.c.l.b16 %v342
    %v997 = vunpack.c.h.b16 %v342
    %v998 = vunpack.c.l.b16 %v343
    %v999 = vunpack.c.h.b16 %v343
    %v1000 = vunpack.c.l.b16 %v344
    %v1001 = vunpack.c.h.b16 %v344
    %v1002 = vunpack.c.l.b16 %v345
    %v1003 = vunpack.c.l.b16 %v346
    %v1004 = vunpack.c.h.b16 %v346
    %v1005 = vunpack.c.l.b16 %v347
    %v1006 = vunpack.c.h.b16 %v347
    %v1007 = vunpack.c.l.b16 %v348
    %v1008 = vunpack.c.h.b16 %v348
    %v1009 = vunpack.c.l.b16 %v349
    %v1010 = vunpack.c.l.b16 %v350
    %v1011 = vunpack.c.h.b16 %v350
    %v1012 = vunpack.c.l.b16 %v351
    %v1013 = vunpack.c.h.b16 %v351
    %v1014 = vunpack.c.l.b16 %v352
    %v1015 = vunpack.c.h.b16 %v352
    %v1016 = vunpack.c.l.b16 %v353
    %v1017 = vunpack.c.l.b16 %v354
    %v1018 = vunpack.c.h.b16 %v354
    %v1019 = vunpack.c.l.b16 %v355
    %v1020 = vunpack.c.h.b16 %v355
    %v1021 = vunpack.c.l.b16 %v356
    %v1022 = vunpack.c.h.b16 %v356
    %v1023 = vunpack.c.l.b16 %v357
    %v1024 = vunpack.c.l.b16 %v358
    %v1025 = vunpack.c.h.b16 %v358
    %v1026 = vunpack.c.l.b16 %v359
    %v1027 = vunpack.c.h.b16 %v359
    %v1028 = vunpack.c.l.b16 %v360
    %v1029 = vunpack.c.h.b16 %v360
    %v1030 = vunpack.c.l.b16 %v361
    %v1031 = vunpack.c.l.b16 %v362
    %v1032 = vunpack.c.h.b16 %v362
    %v1033 = vunpack.c.l.b16 %v363
    %v1034 = vunpack.c.h.b16 %v363
    %v1035 = vunpack.c.l.b16 %v364
    %v1036 = vunpack.c.h.b16 %v364
    %v1037 = vunpack.c.l.b16 %v365
    %v1038 = vunpack.c.l.b16 %v366
    %v1039 = vunpack.c.h.b16 %v366
    %v1040 = vunpack.c.l.b16 %v367
    %v1041 = vunpack.c.h.b16 %v367
    %v1042 = vunpack.c.l.b16 %v368
    %v1043 = vunpack.c.h.b16 %v368
    %v1044 = vunpack.c.l.b16 %v369
    %v1045 = vunpack.c.l.b16 %v370
    %v1046 = vunpack.c.h.b16 %v370
    %v1047 = vunpack.c.l.b16 %v371
    %v1048 = vunpack.c.h.b16 %v371
    %v1049 = vunpack.c.l.b16 %v372
    %v1050 = vunpack.c.h.b16 %v372
    %v1051 = vunpack.c.l.b16 %v373
    %v1052 = vunpack.c.l.b16 %v374
    %v1053 = vunpack.c.h.b16 %v374
    %v1054 = vunpack.c.l.b16 %v375
    %v1055 = vunpack.c.h.b16 %v375
    %v1056 = vunpack.c.l.b16 %v376
    %v1057 = vunpack.c.h.b16 %v376
    %v1058 = vunpack.c.l.b16 %v377
    %v1059 = vunpack.c.l.b16 %v378
    %v1060 = vunpack.c.h.b16 %v378
    %v1061 = vunpack.c.l.b16 %v379
    %v1062 = vunpack.c.h.b16 %v379
    %v1063 = vunpack.c.l.b16 %v380
    %v1064 = vunpack.c.h.b16 %v380
    %v1065 = vunpack.c.l.b16 %v381
    %v1066 = vunpack.c.l.b16 %v382
    %v1067 = vunpack.c.h.b16 %v382
    %v1068 = vunpack.c.l.b16 %v383
    %v1069 = vunpack.c.h.b16 %v383
    %v1070 = vunpack.c.l.b16 %v384
    %v1071 = vunpack.c.h.b16 %v384
    %v1072 = vunpack.c.l.b16 %v385
    %v1073 = vunpack.c.l.b16 %v386
    %v1074 = vunpack.c.h.b16 %v386
    %v1075 = vunpack.c.l.b16 %v387
    %v1076 = vunpack.c.h.b16 %v387
    %v1077 = vunpack.c.l.b16 %v388
    %v1078 = vunpack.c.h.b16 %v388
    %v1079 = vunpack.c.l.b16 %v389
    %v1080 = vunpack.c.l.b16 %v390
    %v1081 = vunpack.c.h.b16 %v390
    %v1082 = vunpack.c.l.b16 %v391
    %v1083 = vunpack.c.h.b16 %v391
    %v1084 = vunpack.c.l.b16 %v392
    %v1085 = vunpack.c.h.b16 %v392
    %v1086 = vunpack.c.l.b16 %v393
    %v1087 = vunpack.c.l.b16 %v394
    %v1088 = vunpack.c.h.b16 %v394
    %v1089 = vunpack.c.l.b16 %v395
    %v1090 = vunpack.c.h.b16 %v395
    %v1091 = vunpack.c.l.b16 %v396
    %v1092 = vunpack.c.h.b16 %v396
    %v1093 = vunpack.c.l.b16 %v397
    %v1094 = vunpack.c.l.b16 %v398
    %v1095 = vunpack.c.h.b16 %v398
    %v1096 = vunpack.c.l.b16 %v399
    %v1097 = vunpack.c.h.b16 %v399
    %v1098 = vunpack.c.l.b16 %v400
    %v1099 = vunpack.c.h.b16 %v400
    %v1100 = vunpack.c.l.b16 %v401
    %v1101 = vunpack.c.l.b16 %v402
    %v1102 = vunpack.c.h.b16 %v402
    %v1103 = vunpack.c.l.b16 %v403
    %v1104 = vunpack.c.h.b16 %v403
    %v1105 = vunpack.c.l.b16 %v404
    %v1106 = vunpack.c.h.b16 %v404
    %v1107 = vunpack.c.l.b16 %v405
    %v1108 = vunpack.c.l.b16 %v406
    %v1109 = vunpack.c.h.b16 %v406
    %v1110 = vunpack.c.l.b16 %v407
    %v1111 = vunpack.c.h.b16 %v407
    %v1112 = vunpack.c.l.b16 %v408
    %v1113 = vunpack.c.h.b16 %v408
    %v1114 = vunpack.c.l.b16 %v409
    %v1115 = vunpack.c.l.b16 %v410
    %v1116 = vunpack.c.h.b16 %v410
    %v1117 = vunpack.c.l.b16 %v411
    %v1118 = vunpack.c.h.b16 %v411
    %v1119 = vunpack.c.l.b16 %v412
    %v1120 = vunpack.c.h.b16 %v412
    %v1121 = vunpack.c.l.b16 %v413
    %v1122 = vunpack.c.l.b16 %v414
    %v1123 = vunpack.c.h.b16 %v414
    %v1124 = vunpack.c.l.b16 %v415
    %v1125 = vunpack.c.h.b16 %v415
    %v1126 = vunpack.c.l.b16 %v416
    %v1127 = vunpack.c.h.b16 %v416
    %v1128 = vunpack.c.l.b16 %v417
    %v1129 = vunpack.c.l.b16 %v418
    %v1130 = vunpack.c.h.b16 %v418
    %v1131 = vunpack.c.l.b16 %v419
    %v1132 = vunpack.c.h.b16 %v419
    %v1133 = vunpack.c.l.b16 %v420
    %v1134 = vunpack.c.h.b16 %v420
    %v1135 = vunpack.c.l.b16 %v421
    %v1136 = vunpack.c.l.b16 %v422
    %v1137 = vunpack.c.h.b16 %v422
    %v1138 = vunpack.c.l.b16 %v423
    %v1139 = vunpack.c.h.b16 %v423
    %v1140 = vunpack.c.l.b16 %v424
    %v1141 = vunpack.c.h.b16 %v424
    %v1142 = vunpack.c.l.b16 %v425
    %v1143 = vunpack.c.l.b16 %v426
    %v1144 = vunpack.c.h.b16 %v426
    %v1145 = vunpack.c.l.b16 %v427
    %v1146 = vunpack.c.h.b16 %v427
    %v1147 = vunpack.c.l.b16 %v428
    %v1148 = vunpack.c.h.b16 %v428
    %v1149 = vunpack.c.l.b16 %v429
    %v1150 = vunpack.c.l.b16 %v430
    %v1151 = vunpack.c.h.b16 %v430
    %v1152 = vunpack.c.l.b16 %v431
    %v1153 = vunpack.c.h.b16 %v431
    %v1154 = vunpack.c.l.b16 %v432
    %v1155 = vunpack.c.h.b16 %v432
    %v1156 = vunpack.c.l.b16 %v433
    %v1157 = vunpack.c.l.b16 %v434
    %v1158 = vunpack.c.h.b16 %v434
    %v1159 = vunpack.c.l.b16 %v435
    %v1160 = vunpack.c.h.b16 %v435
    %v1161 = vunpack.c.l.b16 %v436
    %v1162 = vunpack.c.h.b16 %v436
    %v1163 = vunpack.c.l.b16 %v437
    %v1164 = vunpack.c.l.b16 %v438
    %v1165 = vunpack.c.h.b16 %v438
    %v1166 = vunpack.c.l.b16 %v439
    %v1167 = vunpack.c.h.b16 %v439
    %v1168 = vunpack.c.l.b16 %v440
    %v1169 = vunpack.c.h.b16 %v440
    %v1170 = vunpack.c.l.b16 %v441
    %v1171 = vunpack.c.l.b16 %v442
    %v1172 = vunpack.c.h.b16 %v442
    %v1173 = vunpack.c.l.b16 %v443
    %v1174 = vunpack.c.h.b16 %v443
    %v1175 = vunpack.c.l.b16 %v444
    %v1176 = vunpack.c.h.b16 %v444
    %v1177 = vunpack.c.l.b16 %v445
    %v1178 = vunpack.c.l.b16 %v446
    %v1179 = vunpack.c.h.b16 %v446
    %v1180 = vunpack.c.l.b16 %v447
    %v1181 = vunpack.c.h.b16 %v447
    %v1182 = vunpack.c.l.b16 %v448
    %v1183 = vunpack.c.h.b16 %v448
    %v1184 = vunpack.c.l.b16 %v449
    %v1185 = vunpack.c.l.b16 %v450
    %v1186 = vunpack.c.h.b16 %v450
    %v1187 = vunpack.c.l.b16 %v451
    %v1188 = vunpack.c.h.b16 %v451
    %v1189 = vunpack.c.l.b16 %v452
    %v1190 = vunpack.c.h.b16 %v452
    %v1191 = vunpack.c.l.b16 %v453
    %v1192 = vunpack.c.l.b16 %v454
    %v1193 = vunpack.c.h.b16 %v454
    %v1194 = vunpack.c.l.b16 %v455
    %v1195 = vunpack.c.h.b16 %v455
    %v1196 = vunpack.c.l.b16 %v456
    %v1197 = vunpack.c.h.b16 %v456
    %v1198 = vunpack.c.l.b16 %v457
    %v1199 = vpack.c.b16 %v758, %v751
    %v1200 = vpack.c.b16 %v759, %v752
    %v1201 = vpack.c.b16 %v760, %v753
    %v1202 = vpack.c.b16 %v761, %v754
    %v1203 = vpack.c.b16 %v762, %v755
    %v1204 = vpack.c.b16 %v763, %v756
    %v1205 = vpack.c.b16 %v764, %v757
    %v1206 = vpack.c.b16 %v772, %v765
    %v1207 = vpack.c.b16 %v773, %v766
    %v1208 = vpack.c.b16 %v774, %v767
    %v1209 = vpack.c.b16 %v775, %v768
    %v1210 = vpack.c.b16 %v776, %v769
    %v1211 = vpack.c.b16 %v777, %v770
    %v1212 = vpack.c.b16 %v778, %v771
    %v1213 = vpack.c.b16 %v786, %v779
    %v1214 = vpack.c.b16 %v787, %v780
    %v1215 = vpack.c.b16 %v788, %v781
    %v1216 = vpack.c.b16 %v789, %v782
    %v1217 = vpack.c.b16 %v790, %v783
    %v1218 = vpack.c.b16 %v791, %v784
    %v1219 = vpack.c.b16 %v792, %v785
    %v1220 = vpack.c.b16 %v800, %v793
    %v1221 = vpack.c.b16 %v801, %v794
    %v1222 = vpack.c.b16 %v802, %v795
    %v1223 = vpack.c.b16 %v803, %v796
    %v1224 = vpack.c.b16 %v804, %v797
    %v1225 = vpack.c.b16 %v805, %v798
    %v1226 = vpack.c.b16 %v806, %v799
    %v1227 = vpack.c.b16 %v814, %v807
    %v1228 = vpack.c.b16 %v815, %v808
    %v1229 = vpack.c.b16 %v816, %v809
    %v1230 = vpack.c.b16 %v817, %v810
    %v1231 = vpack.c.b16 %v818, %v811
    %v1232 = vpack.c.b16 %v819, %v812
    %v1233 = vpack.c.b16 %v820, %v813
    %v1234 = vpack.c.b16 %v828, %v821
    %v1235 = vpack.c.b16 %v829, %v822
    %v1236 = vpack.c.b16 %v830, %v823
    %v1237 = vpack.c.b16 %v831, %v824
    %v1238 = vpack.c.b16 %v832, %v825
    %v1239 = vpack.c.b16 %v833, %v826
    %v1240 = vpack.c.b16 %v834, %v827
    %v1241 = vpack.c.b16 %v842, %v835
    %v1242 = vpack.c.b16 %v843, %v836
    %v1243 = vpack.c.b16 %v844, %v837
    %v1244 = vpack.c.b16 %v845, %v838
    %v1245 = vpack.c.b16 %v846, %v839
    %v1246 = vpack.c.b16 %v847, %v840
    %v1247 = vpack.c.b16 %v848, %v841
    %v1248 = vpack.c.b16 %v856, %v849
    %v1249 = vpack.c.b16 %v857, %v850
    %v1250 = vpack.c.b16 %v858, %v851
    %v1251 = vpack.c.b16 %v859, %v852
    %v1252 = vpack.c.b16 %v860, %v853
    %v1253 = vpack.c.b16 %v861, %v854
    %v1254 = vpack.c.b16 %v862, %v855
    %v1255 = vpack.c.b16 %v870, %v863
    %v1256 = vpack.c.b16 %v871, %v864
    %v1257 = vpack.c.b16 %v872, %v865
    %v1258 = vpack.c.b16 %v873, %v866
    %v1259 = vpack.c.b16 %v874, %v867
    %v1260 = vpack.c.b16 %v875, %v868
    %v1261 = vpack.c.b16 %v876, %v869
    %v1262 = vpack.c.b16 %v884, %v877
    %v1263 = vpack.c.b16 %v885, %v878
    %v1264 = vpack.c.b16 %v886, %v879
    %v1265 = vpack.c.b16 %v887, %v880
    %v1266 = vpack.c.b16 %v888, %v881
    %v1267 = vpack.c.b16 %v889, %v882
    %v1268 = vpack.c.b16 %v890, %v883
    %v1269 = vpack.c.b16 %v898, %v891
    %v1270 = vpack.c.b16 %v899, %v892
    %v1271 = vpack.c.b16 %v900, %v893
    %v1272 = vpack.c.b16 %v901, %v894
    %v1273 = vpack.c.b16 %v902, %v895
    %v1274 = vpack.c.b16 %v903, %v896
    %v1275 = vpack.c.b16 %v904, %v897
    %v1276 = vpack.c.b16 %v912, %v905
    %v1277 = vpack.c.b16 %v913, %v906
    %v1278 = vpack.c.b16 %v914, %v907
    %v1279 = vpack.c.b16 %v915, %v908
    %v1280 = vpack.c.b16 %v916, %v909
    %v1281 = vpack.c.b16 %v917, %v910
    %v1282 = vpack.c.b16 %v918, %v911
    %v1283 = vpack.c.b16 %v926, %v919
    %v1284 = vpack.c.b16 %v927, %v920
    %v1285 = vpack.c.b16 %v928, %v921
    %v1286 = vpack.c.b16 %v929, %v922
    %v1287 = vpack.c.b16 %v930, %v923
    %v1288 = vpack.c.b16 %v931, %v924
    %v1289 = vpack.c.b16 %v932, %v925
    %v1290 = vpack.c.b16 %v940, %v933
    %v1291 = vpack.c.b16 %v941, %v934
    %v1292 = vpack.c.b16 %v942, %v935
    %v1293 = vpack.c.b16 %v943, %v936
    %v1294 = vpack.c.b16 %v944, %v937
    %v1295 = vpack.c.b16 %v945, %v938
    %v1296 = vpack.c.b16 %v946, %v939
    %v1297 = vpack.c.b16 %v954, %v947
    %v1298 = vpack.c.b16 %v955, %v948
    %v1299 = vpack.c.b16 %v956, %v949
    %v1300 = vpack.c.b16 %v957, %v950
    %v1301 = vpack.c.b16 %v958, %v951
    %v1302 = vpack.c.b16 %v959, %v952
    %v1303 = vpack.c.b16 %v960, %v953
    %v1304 = vpack.c.b16 %v968, %v961
    %v1305 = vpack.c.b16 %v969, %v962
    %v1306 = vpack.c.b16 %v970, %v963
    %v1307 = vpack.c.b16 %v971, %v964
    %v1308 = vpack.c.b16 %v972, %v965
    %v1309 = vpack.c.b16 %v973, %v966
    %v1310 = vpack.c.b16 %v974, %v967
    %v1311 = vpack.c.b16 %v982, %v975
    %v1312 = vpack.c.b16 %v983, %v976
    %v1313 = vpack.c.b16 %v984, %v977
    %v1314 = vpack.c.b16 %v985, %v978
    %v1315 = vpack.c.b16 %v986, %v979
    %v1316 = vpack.c.b16 %v987, %v980
    %v1317 = vpack.c.b16 %v988, %v981
    %v1318 = vpack.c.b16 %v996, %v989
    %v1319 = vpack.c.b16 %v997, %v990
    %v1320 = vpack.c.b16 %v998, %v991
    %v1321 = vpack.c.b16 %v999, %v992
    %v1322 = vpack.c.b16 %v1000, %v993
    %v1323 = vpack.c.b16 %v1001, %v994
    %v1324 = vpack.c.b16 %v1002, %v995
    %v1325 = vpack.c.b16 %v1010, %v1003
    %v1326 = vpack.c.b16 %v1011, %v1004
    %v1327 = vpack.c.b16 %v1012, %v1005
    %v1328 = vpack.c.b16 %v1013, %v1006
    %v1329 = vpack.c.b16 %v1014, %v1007
    %v1330 = vpack.c.b16 %v1015, %v1008
    %v1331 = vpack.c.b16 %v1016, %v1009
    %v1332 = vpack.c.b16 %v1024, %v1017
    %v1333 = vpack.c.b16 %v1025, %v1018
    %v1334 = vpack.c.b16 %v1026, %v1019
    %v1335 = vpack.c.b16 %v1027, %v1020
    %v1336 = vpack.c.b16 %v1028, %v1021
    %v1337 = vpack.c.b16 %v1029, %v1022
    %v1338 = vpack.c.b16 %v1030, %v1023
    %v1339 = vpack.c.b16 %v1038, %v1031
    %v1340 = vpack.c.b16 %v1039, %v1032
    %v1341 = vpack.c.b16 %v1040, %v1033
    %v1342 = vpack.c.b16 %v1041, %v1034
    %v1343 = vpack.c.b16 %v1042, %v1035
    %v1344 = vpack.c.b16 %v1043, %v1036
    %v1345 = vpack.c.b16 %v1044, %v1037
    %v1346 = vpack.c.b16 %v1052, %v1045
    %v1347 = vpack.c.b16 %v1053, %v1046
    %v1348 = vpack.c.b16 %v1054, %v1047
    %v1349 = vpack.c.b16 %v1055, %v1048
    %v1350 = vpack.c.b16 %v1056, %v1049
    %v1351 = vpack.c.b16 %v1057, %v1050
    %v1352 = vpack.c.b16 %v1058, %v1051
    %v1353 = vpack.c.b16 %v1066, %v1059
    %v1354 = vpack.c.b16 %v1067, %v1060
    %v1355 = vpack.c.b16 %v1068, %v1061
    %v1356 = vpack.c.b16 %v1069, %v1062
    %v1357 = vpack.c.b16 %v1070, %v1063
    %v1358 = vpack.c.b16 %v1071, %v1064
    %v1359 = vpack.c.b16 %v1072, %v1065
    %v1360 = vpack.c.b16 %v1080, %v1073
    %v1361 = vpack.c.b16 %v1081, %v1074
    %v1362 = vpack.c.b16 %v1082, %v1075
    %v1363 = vpack.c.b16 %v1083, %v1076
    %v1364 = vpack.c.b16 %v1084, %v1077
    %v1365 = vpack.c.b16 %v1085, %v1078
    %v1366 = vpack.c.b16 %v1086, %v1079
    %v1367 = vpack.c.b16 %v1094, %v1087
    %v1368 = vpack.c.b16 %v1095, %v1088
    %v1369 = vpack.c.b16 %v1096, %v1089
    %v1370 = vpack.c.b16 %v1097, %v1090
    %v1371 = vpack.c.b16 %v1098, %v1091
    %v1372 = vpack.c.b16 %v1099, %v1092
    %v1373 = vpack.c.b16 %v1100, %v1093
    %v1374 = vpack.c.b16 %v1108, %v1101
    %v1375 = vpack.c.b16 %v1109, %v1102
    %v1376 = vpack.c.b16 %v1110, %v1103
    %v1377 = vpack.c.b16 %v1111, %v1104
    %v1378 = vpack.c.b16 %v1112, %v1105
    %v1379 = vpack.c.b16 %v1113, %v1106
    %v1380 = vpack.c.b16 %v1114, %v1107
    %v1381 = vpack.c.b16 %v1122, %v1115
    %v1382 = vpack.c.b16 %v1123, %v1116
    %v1383 = vpack.c.b16 %v1124, %v1117
    %v1384 = vpack.c.b16 %v1125, %v1118
    %v1385 = vpack.c.b16 %v1126, %v1119
    %v1386 = vpack.c.b16 %v1127, %v1120
    %v1387 = vpack.c.b16 %v1128, %v1121
    %v1388 = vpack.c.b16 %v1136, %v1129
    %v1389 = vpack.c.b16 %v1137, %v1130
    %v1390 = vpack.c.b16 %v1138, %v1131
    %v1391 = vpack.c.b16 %v1139, %v1132
    %v1392 = vpack.c.b16 %v1140, %v1133
    %v1393 = vpack.c.b16 %v1141, %v1134
    %v1394 = vpack.c.b16 %v1142, %v1135
    %v1395 = vpack.c.b16 %v1150, %v1143
    %v1396 = vpack.c.b16 %v1151, %v1144
    %v1397 = vpack.c.b16 %v1152, %v1145
    %v1398 = vpack.c.b16 %v1153, %v1146
    %v1399 = vpack.c.b16 %v1154, %v1147
    %v1400 = vpack.c.b16 %v1155, %v1148
    %v1401 = vpack.c.b16 %v1156, %v1149
    %v1402 = vpack.c.b16 %v1164, %v1157
    %v1403 = vpack.c.b16 %v1165, %v1158
    %v1404 = vpack.c.b16 %v1166, %v1159
    %v1405 = vpack.c.b16 %v1167, %v1160
    %v1406 = vpack.c.b16 %v1168, %v1161
    %v1407 = vpack.c.b16 %v1169, %v1162
    %v1408 = vpack.c.b16 %v1170, %v1163
    %v1409 = vpack.c.b16 %v1178, %v1171
    %v1410 = vpack.c.b16 %v1179, %v1172
    %v1411 = vpack.c.b16 %v1180, %v1173
    %v1412 = vpack.c.b16 %v1181, %v1174
    %v1413 = vpack.c.b16 %v1182, %v1175
    %v1414 = vpack.c.b16 %v1183, %v1176
    %v1415 = vpack.c.b16 %v1184, %v1177
    %v1416 = vpack.c.b16 %v1192, %v1185
    %v1417 = vpack.c.b16 %v1193, %v1186
    %v1418 = vpack.c.b16 %v1194, %v1187
    %v1419 = vpack.c.b16 %v1195, %v1188
    %v1420 = vpack.c.b16 %v1196, %v1189
    %v1421 = vpack.c.b16 %v1197, %v1190
    %v1422 = vpack.c.b16 %v1198, %v1191
    %1647 = vmatprep.subr.bf16.mxu0 %v1200
    %1648 = vmatpush1.bf16.msra.mxu0 %v1199
    %1649 = vmatprep.subr.bf16.mxu0 %v1207
    %1650 = vmatpush1.bf16.msra.mxu0 %v1206
    %1651 = vmatprep.subr.bf16.mxu0 %v1214
    %1652 = vmatpush1.bf16.msra.mxu0 %v1213
    %1653 = vmatprep.subr.bf16.mxu0 %v1221
    %1654 = vmatpush1.bf16.msra.mxu0 %v1220
    %1655 = vmatprep.subr.bf16.mxu0 %v1228
    %1656 = vmatpush1.bf16.msra.mxu0 %v1227
    %1657 = vmatprep.subr.bf16.mxu0 %v1235
    %1658 = vmatpush1.bf16.msra.mxu0 %v1234
    %1659 = vmatprep.subr.bf16.mxu0 %v1242
    %1660 = vmatpush1.bf16.msra.mxu0 %v1241
    %1661 = vmatprep.subr.bf16.mxu0 %v1249
    %1662 = vmatpush1.bf16.msra.mxu0 %v1248
    %1663 = vmatprep.subr.bf16.mxu0 %v1256
    %1664 = vmatpush1.bf16.msra.mxu0 %v1255
    %1665 = vmatprep.subr.bf16.mxu0 %v1263
    %1666 = vmatpush1.bf16.msra.mxu0 %v1262
    %1667 = vmatprep.subr.bf16.mxu0 %v1270
    %1668 = vmatpush1.bf16.msra.mxu0 %v1269
    %1669 = vmatprep.subr.bf16.mxu0 %v1277
    %1670 = vmatpush1.bf16.msra.mxu0 %v1276
    %1671 = vmatprep.subr.bf16.mxu0 %v1284
    %1672 = vmatpush1.bf16.msra.mxu0 %v1283
    %1673 = vmatprep.subr.bf16.mxu0 %v1291
    %1674 = vmatpush1.bf16.msra.mxu0 %v1290
    %1675 = vmatprep.subr.bf16.mxu0 %v1298
    %1676 = vmatpush1.bf16.msra.mxu0 %v1297
    %1677 = vmatprep.subr.bf16.mxu0 %v1305
    %1678 = vmatpush1.bf16.msra.mxu0 %v1304
    %1679 = vmatprep.mubr.bf16.mxu0 %v199
    %1680 = vmatmul.mubr.bf16.gmra.mrb[0].mxu0 %v198
    %v1681 = vpop.f32.mrb[0].mxu0
    %v1682 = vadd.f32 %v463, %v1681
    %v1683 = vpop.f32.mrb[0].mxu0
    %v1684 = vadd.f32 %v467, %v1683
    %v1685 = vpop.f32.mrb[0].mxu0
    %v1686 = vadd.f32 %v463, %v1685
    %v1687 = vpop.f32.mrb[0].mxu0
    %v1688 = vadd.f32 %v467, %v1687
    %1689 = vdwg.mxu0
    %1690 = vmatprep.subr.bf16.mxu0 %v1312
    %1691 = vmatpush1.bf16.msra.mxu0 %v1311
    %1692 = vmatprep.subr.bf16.mxu0 %v1319
    %1693 = vmatpush1.bf16.msra.mxu0 %v1318
    %1694 = vmatprep.subr.bf16.mxu0 %v1326
    %1695 = vmatpush1.bf16.msra.mxu0 %v1325
    %1696 = vmatprep.subr.bf16.mxu0 %v1333
    %1697 = vmatpush1.bf16.msra.mxu0 %v1332
    %1698 = vmatprep.subr.bf16.mxu0 %v1340
    %1699 = vmatpush1.bf16.msra.mxu0 %v1339
    %1700 = vmatprep.subr.bf16.mxu0 %v1347
    %1701 = vmatpush1.bf16.msra.mxu0 %v1346
    %1702 = vmatprep.subr.bf16.mxu0 %v1354
    %1703 = vmatpush1.bf16.msra.mxu0 %v1353
    %1704 = vmatprep.subr.bf16.mxu0 %v1361
    %1705 = vmatpush1.bf16.msra.mxu0 %v1360
    %1706 = vmatprep.subr.bf16.mxu0 %v1368
    %1707 = vmatpush1.bf16.msra.mxu0 %v1367
    %1708 = vmatprep.subr.bf16.mxu0 %v1375
    %1709 = vmatpush1.bf16.msra.mxu0 %v1374
    %1710 = vmatprep.subr.bf16.mxu0 %v1382
    %1711 = vmatpush1.bf16.msra.mxu0 %v1381
    %1712 = vmatprep.subr.bf16.mxu0 %v1389
    %1713 = vmatpush1.bf16.msra.mxu0 %v1388
    %1714 = vmatprep.subr.bf16.mxu0 %v1396
    %1715 = vmatpush1.bf16.msra.mxu0 %v1395
    %1716 = vmatprep.subr.bf16.mxu0 %v1403
    %1717 = vmatpush1.bf16.msra.mxu0 %v1402
    %1718 = vmatprep.subr.bf16.mxu0 %v1410
    %1719 = vmatpush1.bf16.msra.mxu0 %v1409
    %1720 = vmatprep.subr.bf16.mxu0 %v1417
    %1721 = vmatpush1.bf16.msra.mxu0 %v1416
    %1722 = vmatprep.mubr.bf16.mxu0 %v201
    %1723 = vmatmul.mubr.bf16.gmra.mrb[0].mxu0 %v200
    %v1724 = vpop.f32.mrb[0].mxu0
    %v1725 = vadd.f32 %v1682, %v1724
    %v1726 = vpop.f32.mrb[0].mxu0
    %v1727 = vadd.f32 %v1684, %v1726
    %v1728 = vpop.f32.mrb[0].mxu0
    %v1729 = vadd.f32 %v1686, %v1728
    %v1730 = vpop.f32.mrb[0].mxu0
    %v1731 = vadd.f32 %v1688, %v1730
    %1732 = vdwg.mxu0
    %1733 = vmatprep.subr.bf16.mxu0 %v1202
    %1734 = vmatpush1.bf16.msra.mxu0 %v1201
    %1735 = vmatprep.subr.bf16.mxu0 %v1209
    %1736 = vmatpush1.bf16.msra.mxu0 %v1208
    %1737 = vmatprep.subr.bf16.mxu0 %v1216
    %1738 = vmatpush1.bf16.msra.mxu0 %v1215
    %1739 = vmatprep.subr.bf16.mxu0 %v1223
    %1740 = vmatpush1.bf16.msra.mxu0 %v1222
    %1741 = vmatprep.subr.bf16.mxu0 %v1230
    %1742 = vmatpush1.bf16.msra.mxu0 %v1229
    %1743 = vmatprep.subr.bf16.mxu0 %v1237
    %1744 = vmatpush1.bf16.msra.mxu0 %v1236
    %1745 = vmatprep.subr.bf16.mxu0 %v1244
    %1746 = vmatpush1.bf16.msra.mxu0 %v1243
    %1747 = vmatprep.subr.bf16.mxu0 %v1251
    %1748 = vmatpush1.bf16.msra.mxu0 %v1250
    %1749 = vmatprep.subr.bf16.mxu0 %v1258
    %1750 = vmatpush1.bf16.msra.mxu0 %v1257
    %1751 = vmatprep.subr.bf16.mxu0 %v1265
    %1752 = vmatpush1.bf16.msra.mxu0 %v1264
    %1753 = vmatprep.subr.bf16.mxu0 %v1272
    %1754 = vmatpush1.bf16.msra.mxu0 %v1271
    %1755 = vmatprep.subr.bf16.mxu0 %v1279
    %1756 = vmatpush1.bf16.msra.mxu0 %v1278
    %1757 = vmatprep.subr.bf16.mxu0 %v1286
    %1758 = vmatpush1.bf16.msra.mxu0 %v1285
    %1759 = vmatprep.subr.bf16.mxu0 %v1293
    %1760 = vmatpush1.bf16.msra.mxu0 %v1292
    %1761 = vmatprep.subr.bf16.mxu0 %v1300
    %1762 = vmatpush1.bf16.msra.mxu0 %v1299
    %1763 = vmatprep.subr.bf16.mxu0 %v1307
    %1764 = vmatpush1.bf16.msra.mxu0 %v1306
    %1765 = vmatprep.mubr.bf16.mxu0 %v199
    %1766 = vmatmul.mubr.bf16.gmra.mrb[0].mxu0 %v198
    %v1767 = vpop.f32.mrb[0].mxu0
    %v1768 = vadd.f32 %v471, %v1767
    %v1769 = vpop.f32.mrb[0].mxu0
    %v1770 = vadd.f32 %v475, %v1769
    %v1771 = vpop.f32.mrb[0].mxu0
    %v1772 = vadd.f32 %v471, %v1771
    %v1773 = vpop.f32.mrb[0].mxu0
    %v1774 = vadd.f32 %v475, %v1773
    %1775 = vdwg.mxu0
    %1776 = vmatprep.subr.bf16.mxu0 %v1314
    %1777 = vmatpush1.bf16.msra.mxu0 %v1313
    %1778 = vmatprep.subr.bf16.mxu0 %v1321
    %1779 = vmatpush1.bf16.msra.mxu0 %v1320
    %1780 = vmatprep.subr.bf16.mxu0 %v1328
    %1781 = vmatpush1.bf16.msra.mxu0 %v1327
    %1782 = vmatprep.subr.bf16.mxu0 %v1335
    %1783 = vmatpush1.bf16.msra.mxu0 %v1334
    %1784 = vmatprep.subr.bf16.mxu0 %v1342
    %1785 = vmatpush1.bf16.msra.mxu0 %v1341
    %1786 = vmatprep.subr.bf16.mxu0 %v1349
    %1787 = vmatpush1.bf16.msra.mxu0 %v1348
    %1788 = vmatprep.subr.bf16.mxu0 %v1356
    %1789 = vmatpush1.bf16.msra.mxu0 %v1355
    %1790 = vmatprep.subr.bf16.mxu0 %v1363
    %1791 = vmatpush1.bf16.msra.mxu0 %v1362
    %1792 = vmatprep.subr.bf16.mxu0 %v1370
    %1793 = vmatpush1.bf16.msra.mxu0 %v1369
    %1794 = vmatprep.subr.bf16.mxu0 %v1377
    %1795 = vmatpush1.bf16.msra.mxu0 %v1376
    %1796 = vmatprep.subr.bf16.mxu0 %v1384
    %1797 = vmatpush1.bf16.msra.mxu0 %v1383
    %1798 = vmatprep.subr.bf16.mxu0 %v1391
    %1799 = vmatpush1.bf16.msra.mxu0 %v1390
    %1800 = vmatprep.subr.bf16.mxu0 %v1398
    %1801 = vmatpush1.bf16.msra.mxu0 %v1397
    %1802 = vmatprep.subr.bf16.mxu0 %v1405
    %1803 = vmatpush1.bf16.msra.mxu0 %v1404
    %1804 = vmatprep.subr.bf16.mxu0 %v1412
    %1805 = vmatpush1.bf16.msra.mxu0 %v1411
    %1806 = vmatprep.subr.bf16.mxu0 %v1419
    %1807 = vmatpush1.bf16.msra.mxu0 %v1418
    %1808 = vmatprep.mubr.bf16.mxu0 %v201
    %1809 = vmatmul.mubr.bf16.gmra.mrb[0].mxu0 %v200
    %v1810 = vpop.f32.mrb[0].mxu0
    %v1811 = vadd.f32 %v1768, %v1810
    %v1812 = vpop.f32.mrb[0].mxu0
    %v1813 = vadd.f32 %v1770, %v1812
    %v1814 = vpop.f32.mrb[0].mxu0
    %v1815 = vadd.f32 %v1772, %v1814
    %v1816 = vpop.f32.mrb[0].mxu0
    %v1817 = vadd.f32 %v1774, %v1816
    %1818 = vdwg.mxu0
    %1819 = vmatprep.subr.bf16.mxu0 %v1204
    %1820 = vmatpush1.bf16.msra.mxu0 %v1203
    %1821 = vmatprep.subr.bf16.mxu0 %v1211
    %1822 = vmatpush1.bf16.msra.mxu0 %v1210
    %1823 = vmatprep.subr.bf16.mxu0 %v1218
    %1824 = vmatpush1.bf16.msra.mxu0 %v1217
    %1825 = vmatprep.subr.bf16.mxu0 %v1225
    %1826 = vmatpush1.bf16.msra.mxu0 %v1224
    %1827 = vmatprep.subr.bf16.mxu0 %v1232
    %1828 = vmatpush1.bf16.msra.mxu0 %v1231
    %1829 = vmatprep.subr.bf16.mxu0 %v1239
    %1830 = vmatpush1.bf16.msra.mxu0 %v1238
    %1831 = vmatprep.subr.bf16.mxu0 %v1246
    %1832 = vmatpush1.bf16.msra.mxu0 %v1245
    %1833 = vmatprep.subr.bf16.mxu0 %v1253
    %1834 = vmatpush1.bf16.msra.mxu0 %v1252
    %1835 = vmatprep.subr.bf16.mxu0 %v1260
    %1836 = vmatpush1.bf16.msra.mxu0 %v1259
    %1837 = vmatprep.subr.bf16.mxu0 %v1267
    %1838 = vmatpush1.bf16.msra.mxu0 %v1266
    %1839 = vmatprep.subr.bf16.mxu0 %v1274
    %1840 = vmatpush1.bf16.msra.mxu0 %v1273
    %1841 = vmatprep.subr.bf16.mxu0 %v1281
    %1842 = vmatpush1.bf16.msra.mxu0 %v1280
    %1843 = vmatprep.subr.bf16.mxu0 %v1288
    %1844 = vmatpush1.bf16.msra.mxu0 %v1287
    %1845 = vmatprep.subr.bf16.mxu0 %v1295
    %1846 = vmatpush1.bf16.msra.mxu0 %v1294
    %1847 = vmatprep.subr.bf16.mxu0 %v1302
    %1848 = vmatpush1.bf16.msra.mxu0 %v1301
    %1849 = vmatprep.subr.bf16.mxu0 %v1309
    %1850 = vmatpush1.bf16.msra.mxu0 %v1308
    %1851 = vmatprep.mubr.bf16.mxu0 %v199
    %1852 = vmatmul.mubr.bf16.gmra.mrb[0].mxu0 %v198
    %v1853 = vpop.f32.mrb[0].mxu0
    %v1854 = vadd.f32 %v479, %v1853
    %v1855 = vpop.f32.mrb[0].mxu0
    %v1856 = vadd.f32 %v483, %v1855
    %v1857 = vpop.f32.mrb[0].mxu0
    %v1858 = vadd.f32 %v479, %v1857
    %v1859 = vpop.f32.mrb[0].mxu0
    %v1860 = vadd.f32 %v483, %v1859
    %1861 = vdwg.mxu0
    %1862 = vmatprep.subr.bf16.mxu0 %v1316
    %1863 = vmatpush1.bf16.msra.mxu0 %v1315
    %1864 = vmatprep.subr.bf16.mxu0 %v1323
    %1865 = vmatpush1.bf16.msra.mxu0 %v1322
    %1866 = vmatprep.subr.bf16.mxu0 %v1330
    %1867 = vmatpush1.bf16.msra.mxu0 %v1329
    %1868 = vmatprep.subr.bf16.mxu0 %v1337
    %1869 = vmatpush1.bf16.msra.mxu0 %v1336
    %1870 = vmatprep.subr.bf16.mxu0 %v1344
    %1871 = vmatpush1.bf16.msra.mxu0 %v1343
    %1872 = vmatprep.subr.bf16.mxu0 %v1351
    %1873 = vmatpush1.bf16.msra.mxu0 %v1350
    %1874 = vmatprep.subr.bf16.mxu0 %v1358
    %1875 = vmatpush1.bf16.msra.mxu0 %v1357
    %1876 = vmatprep.subr.bf16.mxu0 %v1365
    %1877 = vmatpush1.bf16.msra.mxu0 %v1364
    %1878 = vmatprep.subr.bf16.mxu0 %v1372
    %1879 = vmatpush1.bf16.msra.mxu0 %v1371
    %1880 = vmatprep.subr.bf16.mxu0 %v1379
    %1881 = vmatpush1.bf16.msra.mxu0 %v1378
    %1882 = vmatprep.subr.bf16.mxu0 %v1386
    %1883 = vmatpush1.bf16.msra.mxu0 %v1385
    %1884 = vmatprep.subr.bf16.mxu0 %v1393
    %1885 = vmatpush1.bf16.msra.mxu0 %v1392
    %1886 = vmatprep.subr.bf16.mxu0 %v1400
    %1887 = vmatpush1.bf16.msra.mxu0 %v1399
    %1888 = vmatprep.subr.bf16.mxu0 %v1407
    %1889 = vmatpush1.bf16.msra.mxu0 %v1406
    %1890 = vmatprep.subr.bf16.mxu0 %v1414
    %1891 = vmatpush1.bf16.msra.mxu0 %v1413
    %1892 = vmatprep.subr.bf16.mxu0 %v1421
    %1893 = vmatpush1.bf16.msra.mxu0 %v1420
    %1894 = vmatprep.mubr.bf16.mxu0 %v201
    %1895 = vmatmul.mubr.bf16.gmra.mrb[0].mxu0 %v200
    %v1896 = vpop.f32.mrb[0].mxu0
    %v1897 = vadd.f32 %v1854, %v1896
    %v1898 = vpop.f32.mrb[0].mxu0
    %v1899 = vadd.f32 %v1856, %v1898
    %v1900 = vpop.f32.mrb[0].mxu0
    %v1901 = vadd.f32 %v1858, %v1900
    %v1902 = vpop.f32.mrb[0].mxu0
    %v1903 = vadd.f32 %v1860, %v1902
    %1904 = vdwg.mxu0
    %1905 = vmatprep.subr.bf16.mxu0 0
    %1906 = vmatpush1.bf16.msra.mxu0 %v1205
    %1907 = vmatprep.subr.bf16.mxu0 0
    %1908 = vmatpush1.bf16.msra.mxu0 %v1212
    %1909 = vmatprep.subr.bf16.mxu0 0
    %1910 = vmatpush1.bf16.msra.mxu0 %v1219
    %1911 = vmatprep.subr.bf16.mxu0 0
    %1912 = vmatpush1.bf16.msra.mxu0 %v1226
    %1913 = vmatprep.subr.bf16.mxu0 0
    %1914 = vmatpush1.bf16.msra.mxu0 %v1233
    %1915 = vmatprep.subr.bf16.mxu0 0
    %1916 = vmatpush1.bf16.msra.mxu0 %v1240
    %1917 = vmatprep.subr.bf16.mxu0 0
    %1918 = vmatpush1.bf16.msra.mxu0 %v1247
    %1919 = vmatprep.subr.bf16.mxu0 0
    %1920 = vmatpush1.bf16.msra.mxu0 %v1254
    %1921 = vmatprep.subr.bf16.mxu0 0
    %1922 = vmatpush1.bf16.msra.mxu0 %v1261
    %1923 = vmatprep.subr.bf16.mxu0 0
    %1924 = vmatpush1.bf16.msra.mxu0 %v1268
    %1925 = vmatprep.subr.bf16.mxu0 0
    %1926 = vmatpush1.bf16.msra.mxu0 %v1275
    %1927 = vmatprep.subr.bf16.mxu0 0
    %1928 = vmatpush1.bf16.msra.mxu0 %v1282
    %1929 = vmatprep.subr.bf16.mxu0 0
    %1930 = vmatpush1.bf16.msra.mxu0 %v1289
    %1931 = vmatprep.subr.bf16.mxu0 0
    %1932 = vmatpush1.bf16.msra.mxu0 %v1296
    %1933 = vmatprep.subr.bf16.mxu0 0
    %1934 = vmatpush1.bf16.msra.mxu0 %v1303
    %1935 = vmatprep.subr.bf16.mxu0 0
    %1936 = vmatpush1.bf16.msra.mxu0 %v1310
    %1937 = vmatprep.mubr.bf16.mxu0 %v199
    %1938 = vmatmul.mubr.bf16.gmra.mrb[0].mxu0 %v198
    %v1939 = vpop.f32.mrb[0].mxu0
    %v1940 = vadd.f32 %v487, %v1939
    %v1941 = vpop.f32.mrb[0].mxu0
    %v1942 = vpop.f32.mrb[0].mxu0
    %v1943 = vadd.f32 %v487, %v1942
    %v1944 = vpop.f32.mrb[0].mxu0
    %1945 = vdwg.mxu0
    %1946 = vmatprep.subr.bf16.mxu0 0
    %1947 = vmatpush1.bf16.msra.mxu0 %v1317
    %1948 = vmatprep.subr.bf16.mxu0 0
    %1949 = vmatpush1.bf16.msra.mxu0 %v1324
    %1950 = vmatprep.subr.bf16.mxu0 0
    %1951 = vmatpush1.bf16.msra.mxu0 %v1331
    %1952 = vmatprep.subr.bf16.mxu0 0
    %1953 = vmatpush1.bf16.msra.mxu0 %v1338
    %1954 = vmatprep.subr.bf16.mxu0 0
    %1955 = vmatpush1.bf16.msra.mxu0 %v1345
    %1956 = vmatprep.subr.bf16.mxu0 0
    %1957 = vmatpush1.bf16.msra.mxu0 %v1352
    %1958 = vmatprep.subr.bf16.mxu0 0
    %1959 = vmatpush1.bf16.msra.mxu0 %v1359
    %1960 = vmatprep.subr.bf16.mxu0 0
    %1961 = vmatpush1.bf16.msra.mxu0 %v1366
    %1962 = vmatprep.subr.bf16.mxu0 0
    %1963 = vmatpush1.bf16.msra.mxu0 %v1373
    %1964 = vmatprep.subr.bf16.mxu0 0
    %1965 = vmatpush1.bf16.msra.mxu0 %v1380
    %1966 = vmatprep.subr.bf16.mxu0 0
    %1967 = vmatpush1.bf16.msra.mxu0 %v1387
    %1968 = vmatprep.subr.bf16.mxu0 0
    %1969 = vmatpush1.bf16.msra.mxu0 %v1394
    %1970 = vmatprep.subr.bf16.mxu0 0
    %1971 = vmatpush1.bf16.msra.mxu0 %v1401
    %1972 = vmatprep.subr.bf16.mxu0 0
    %1973 = vmatpush1.bf16.msra.mxu0 %v1408
    %1974 = vmatprep.subr.bf16.mxu0 0
    %1975 = vmatpush1.bf16.msra.mxu0 %v1415
    %1976 = vmatprep.subr.bf16.mxu0 0
    %1977 = vmatpush1.bf16.msra.mxu0 %v1422
    %1978 = vmatprep.mubr.bf16.mxu0 %v201
    %1979 = vmatmul.mubr.bf16.gmra.mrb[0].mxu0 %v200
    %v1980 = vpop.f32.mrb[0].mxu0
    %v1981 = vadd.f32 %v1940, %v1980
    %v1982 = vpop.f32.mrb[0].mxu0
    %v1983 = vpop.f32.mrb[0].mxu0
    %v1984 = vadd.f32 %v1943, %v1983
    %v1985 = vpop.f32.mrb[0].mxu0
    %1986 = vdwg.mxu0
    %v1987 = vsub.f32 0.0, %v1725
    %v1988 = vsub.f32 0.0, %v1727
    %v1989 = vsub.f32 0.0, %v1811
    %v1990 = vsub.f32 0.0, %v1813
    %v1991 = vsub.f32 0.0, %v1897
    %v1992 = vsub.f32 0.0, %v1899
    %v1993 = vsub.f32 0.0, %v1981
    %v1994 = vsub.f32 0.0, %v1729
    %v1995 = vsub.f32 0.0, %v1731
    %v1996 = vsub.f32 0.0, %v1815
    %v1997 = vsub.f32 0.0, %v1817
    %v1998 = vsub.f32 0.0, %v1901
    %v1999 = vsub.f32 0.0, %v1903
    %v2000 = vsub.f32 0.0, %v1984
    %v2001 = vmul.f32 %v1987, 1.442695
    %v2002 = vpow.pop %v2001
    %v2003 = vmul.f32 %v1988, 1.442695
    %v2004 = vpow.pop %v2003
    %v2005 = vmul.f32 %v1989, 1.442695
    %v2006 = vpow.pop %v2005
    %v2007 = vmul.f32 %v1990, 1.442695
    %v2008 = vpow.pop %v2007
    %v2009 = vmul.f32 %v1991, 1.442695
    %v2010 = vpow.pop %v2009
    %v2011 = vmul.f32 %v1992, 1.442695
    %v2012 = vpow.pop %v2011
    %v2013 = vmul.f32 %v1993, 1.442695
    %v2014 = vpow.pop %v2013
    %v2015 = vmul.f32 %v1994, 1.442695
    %v2016 = vpow.pop %v2015
    %v2017 = vmul.f32 %v1995, 1.442695
    %v2018 = vpow.pop %v2017
    %v2019 = vmul.f32 %v1996, 1.442695
    %v2020 = vpow.pop %v2019
    %v2021 = vmul.f32 %v1997, 1.442695
    %v2022 = vpow.pop %v2021
    %v2023 = vmul.f32 %v1998, 1.442695
    %v2024 = vpow.pop %v2023
    %v2025 = vmul.f32 %v1999, 1.442695
    %v2026 = vpow.pop %v2025
    %v2027 = vmul.f32 %v2000, 1.442695
    %v2028 = vpow.pop %v2027
    %v2029 = vadd.f32 %v2002, 1.0
    %v2030 = vadd.f32 %v2004, 1.0
    %v2031 = vadd.f32 %v2006, 1.0
    %v2032 = vadd.f32 %v2008, 1.0
    %v2033 = vadd.f32 %v2010, 1.0
    %v2034 = vadd.f32 %v2012, 1.0
    %v2035 = vadd.f32 %v2014, 1.0
    %v2036 = vadd.f32 %v2016, 1.0
    %v2037 = vadd.f32 %v2018, 1.0
    %v2038 = vadd.f32 %v2020, 1.0
    %v2039 = vadd.f32 %v2022, 1.0
    %v2040 = vadd.f32 %v2024, 1.0
    %v2041 = vadd.f32 %v2026, 1.0
    %v2042 = vadd.f32 %v2028, 1.0
    %v2043 = vrcp.pop %v2029
    %v2044 = vrcp.pop %v2030
    %v2045 = vrcp.pop %v2031
    %v2046 = vrcp.pop %v2032
    %v2047 = vrcp.pop %v2033
    %v2048 = vrcp.pop %v2034
    %v2049 = vrcp.pop %v2035
    %v2050 = vrcp.pop %v2036
    %v2051 = vrcp.pop %v2037
    %v2052 = vrcp.pop %v2038
    %v2053 = vrcp.pop %v2039
    %v2054 = vrcp.pop %v2040
    %v2055 = vrcp.pop %v2041
    %v2056 = vrcp.pop %v2042
    %2057 = vst [vmem:[#allocation2] sm:$0xff] %v2043
    %2058 = vst [vmem:[#allocation2 + $0x8] sm:$0xff] %v2044
    %2059 = vst [vmem:[#allocation2 + $0x10] sm:$0xff] %v2045
    %2060 = vst [vmem:[#allocation2 + $0x18] sm:$0xff] %v2046
    %2061 = vst [vmem:[#allocation2 + $0x20] sm:$0xff] %v2047
    %2062 = vst [vmem:[#allocation2 + $0x28] sm:$0xff] %v2048
    %2063 = vst [vmem:[#allocation2 + $0x30] sm:$0xff] %v2049
    %2064 = vst [vmem:[#allocation2 + $0x38] sm:$0xff] %v2050
    %2065 = vst [vmem:[#allocation2 + $0x40] sm:$0xff] %v2051
    %2066 = vst [vmem:[#allocation2 + $0x48] sm:$0xff] %v2052
    %2067 = vst [vmem:[#allocation2 + $0x50] sm:$0xff] %v2053
    %2068 = vst [vmem:[#allocation2 + $0x58] sm:$0xff] %v2054
    %2069 = vst [vmem:[#allocation2 + $0x60] sm:$0xff] %v2055
    %2070 = vst [vmem:[#allocation2 + $0x68] sm:$0xff] %v2056
    // Predicated region
    $region22: #{decoder_forward.1} parent=1 // pred_check
      _
    $region23: #{decoder_forward.1} parent=1 // pred_check_branch
      %2072 = sbr.rel (0) target = $region25
    $region24: #{decoder_forward.1} parent=1 // pred_region
      %s2074 = ssub.s32 1792, 1792
      %2075 = vsyncadd [#allocation3], %s2074
      %s2076 = sshll.u32 [#allocation2], 4
      %s2077 = int_to_ptr.vmem [resolvable:$true] %s2076
      %2082 = dma.vmem_to_hbm [thread:$0]  %s2077, 1792, %s5, [#allocation3], 896, 896, 56
    $region25: #{decoder_forward.1} parent=1 // pred_fallthru
      _
    // Predicated region
    $region26: #{decoder_forward.1} parent=1 // pred_check
      _
    $region27: #{decoder_forward.1} parent=1 // pred_check_branch
      %2084 = sbr.rel (0) target = $region29
    $region28: #{decoder_forward.1} parent=1 // pred_region
      %2085 = dma.done [#allocation3], 1792
    $region29: #{decoder_forward.1} parent=1 // pred_fallthru
      _
    %2086 = vsyncpa [#allocation3], 1

</llo_original>
